<compile_context>
chip_gen: v7x
topology: tpu7x:2x2x1
jax: 0.10.0
libtpu: 0.0.40
codegen_flags: <defaults>
</compile_context>

<pallas_src>
import jax
import jax.numpy as jnp
from jax.experimental import pallas as pl
from jax.experimental.pallas import tpu as pltpu

# ---------------- small sizes consistent with the module ----------------
VOCAB = 32          # len(CHAR2ID_WITH_PAD), scaled down
EMB = 32            # embedding_dim
HID = 32            # hidden_size
OUT = VOCAB         # fc output = vocab size
B, T = 2, 8         # batch, sequence length

# ---------------- packed weight-slab row layout (all 128 lanes wide) ----------------
_R_EMBIH1 = 0                   # 32 rows : emb @ Wih1 + b1  (layer-1 x-path, bias folded)
_R_WHH1 = _R_EMBIH1 + VOCAB     # 32 rows : Whh1
_R_W2 = _R_WHH1 + HID           # 64 rows : [Wih2 ; Whh2]
_R_WFC = _R_W2 + 2 * HID        # 32 rows : fc weight, zero-padded to 128 lanes
_R_BIAS = _R_WFC + HID          # 16 rows : row 0 = b2, row 1 = fc bias (padded), rest 0
_SLAB_ROWS = _R_BIAS + 16       # 176 (multiple of the bf16 sublane tile of 16)


# ---------------- LSTM cell (gate order pre-permuted to [i, f, o, g]) ----------------
def _lstm_cell(g, c):
    sig = jax.nn.sigmoid(g[:, :3 * HID])       # one EUP pass covers i, f, o
    i = sig[:, 0 * HID:1 * HID]
    f = sig[:, 1 * HID:2 * HID]
    o = sig[:, 2 * HID:3 * HID]
    gg = jnp.tanh(g[:, 3 * HID:4 * HID])
    c_new = f * c + i * gg
    h_new = o * jnp.tanh(c_new)
    return h_new, c_new


# ---------------- Pallas kernel ----------------
def _nextchar_lstm_kernel(onehot_ref, slab_ref, out_ref):
    # onehot_ref : (T*B, VOCAB) bf16, time-major (row = t*B + b), exact 0/1 values
    # slab_ref   : (_SLAB_ROWS, 128) bf16 packed weights/biases (layout above)
    # out_ref    : (B, OUT) f32
    w_embih1 = slab_ref[_R_EMBIH1:_R_EMBIH1 + VOCAB, :]        # (32, 128)
    whh1 = slab_ref[_R_WHH1:_R_WHH1 + HID, :]                  # (32, 128)
    w2 = slab_ref[_R_W2:_R_W2 + 2 * HID, :]                    # (64, 128)
    wfc = slab_ref[_R_WFC:_R_WFC + HID, :]                     # (32, 128)
    bias_blk = slab_ref[_R_BIAS:_R_BIAS + 16, :].astype(jnp.float32)
    b2 = bias_blk[0:1, :]                                      # (1, 128)
    bfc = bias_blk[1:2, :]                                     # (1, 128), lanes >= OUT are 0

    # Layer-1 pre-activations for ALL timesteps in a single prologue matmul
    # (embedding gather + Wih1 + b1 all folded into the one-hot matmul).
    gates1_x = jnp.dot(onehot_ref[...], w_embih1,
                       preferred_element_type=jnp.float32)     # (T*B, 4H) f32

    h1 = jnp.zeros((B, HID), jnp.float32)
    c1 = jnp.zeros((B, HID), jnp.float32)
    h2 = jnp.zeros((B, HID), jnp.float32)
    c2 = jnp.zeros((B, HID), jnp.float32)

    # Static unroll of the T=8 recurrence: ONE recurrent matmul per layer per step,
    # gates/state live in vregs; MXU operands bf16, accumulation + gate math f32.
    # TODO(synk): inter-layer dropout (p=0.5) is a train-mode stochastic op; this is the
    # eval-mode forward and omits it.
    for t in range(T):
        g1 = gates1_x[t * B:(t + 1) * B, :] + jnp.dot(
            h1.astype(jnp.bfloat16), whh1, preferred_element_type=jnp.float32)
        h1, c1 = _lstm_cell(g1, c1)

        h12 = jnp.concatenate([h1, h2], axis=-1).astype(jnp.bfloat16)   # (B, 2H)
        g2 = jnp.dot(h12, w2, preferred_element_type=jnp.float32) + b2
        h2, c2 = _lstm_cell(g2, c2)

    # fc applied to the top-layer hidden state of the LAST timestep.
    logits = jnp.dot(h2.astype(jnp.bfloat16), wfc,
                     preferred_element_type=jnp.float32) + bfc          # (B, 128)
    out_ref[...] = logits[:, :OUT]


# ---------------- wrapper ----------------
def _permute_gates_rows(w):
    # PyTorch gate-row order [i, f, g, o] -> [i, f, o, g]
    return jnp.concatenate(
        [w[0:HID], w[HID:2 * HID], w[3 * HID:4 * HID], w[2 * HID:3 * HID]], axis=0)


def nextchar_lstm_forward(x_ids, params):
    f32 = jnp.float32
    # One-time weight prep (transpose, gate permutation, bias fusion, folds) — tiny.
    wih1 = _permute_gates_rows(params["wih_l0"]).astype(f32).T           # (E, 4H)
    whh1 = _permute_gates_rows(params["whh_l0"]).astype(f32).T           # (H, 4H)
    b1 = _permute_gates_rows(
        (params["bih_l0"] + params["bhh_l0"])[:, None]).reshape(1, 4 * HID)
    wih2 = _permute_gates_rows(params["wih_l1"]).astype(f32).T           # (H, 4H)
    whh2 = _permute_gates_rows(params["whh_l1"]).astype(f32).T           # (H, 4H)
    b2 = _permute_gates_rows(
        (params["bih_l1"] + params["bhh_l1"])[:, None]).reshape(1, 4 * HID)

    # Fold embedding table + b1 into the layer-1 x-path table (exact for one-hot rows).
    emb_wih1 = params["emb"].astype(f32) @ wih1 + b1                     # (VOCAB, 4H)
    # Merge layer-2 input & recurrent weights into one stacked slab.
    w2 = jnp.concatenate([wih2, whh2], axis=0)                           # (2H, 4H)
    # fc weight/bias, zero-padded to 128 lanes.
    wfc = jnp.pad(params["fc_w"].astype(f32).T, ((0, 0), (0, 128 - OUT)))  # (H, 128)
    bias_blk = jnp.zeros((16, 128), f32)
    bias_blk = bias_blk.at[0, :4 * HID].set(b2[0])
    bias_blk = bias_blk.at[1, :OUT].set(params["fc_b"].astype(f32))

    # Single bf16 weight/bias slab (one DMA instead of nine).
    slab = jnp.concatenate([emb_wih1, whh1, w2, wfc, bias_blk],
                           axis=0).astype(jnp.bfloat16)                  # (176, 128)

    # Time-major one-hot built in the wrapper (row = t*B + b); exact in bf16.
    ids_col = x_ids.T.reshape(T * B, 1).astype(jnp.int32)
    onehot = (ids_col == jnp.arange(VOCAB, dtype=jnp.int32)[None, :]
              ).astype(jnp.bfloat16)                                     # (T*B, VOCAB)

    full = lambda shape: pl.BlockSpec(shape, lambda i: (0,) * len(shape))

    return pl.pallas_call(
        _nextchar_lstm_kernel,
        out_shape=jax.ShapeDtypeStruct((B, OUT), jnp.float32),
        grid=(1,),
        in_specs=[full((T * B, VOCAB)), full((_SLAB_ROWS, 128))],
        out_specs=full((B, OUT)),
        compiler_params=pltpu.CompilerParams(dimension_semantics=("arbitrary",)),
    )(onehot, slab)


# ---------------- pure-JAX reference (PyTorch conventions) ----------------
def reference_forward(x_ids, params):
    emb = jnp.take(params["emb"], x_ids, axis=0).astype(jnp.float32)     # (B, T, E)

    def run_layer(inputs, wih, whh, bih, bhh):
        bias = bih + bhh

        def step(carry, x_t):
            h, c = carry
            g = x_t @ wih.T + h @ whh.T + bias
            i = jax.nn.sigmoid(g[:, 0 * HID:1 * HID])
            f = jax.nn.sigmoid(g[:, 1 * HID:2 * HID])
            gg = jnp.tanh(g[:, 2 * HID:3 * HID])
            o = jax.nn.sigmoid(g[:, 3 * HID:4 * HID])
            c = f * c + i * gg
            h = o * jnp.tanh(c)
            return (h, c), h

        init = (jnp.zeros((B, HID), jnp.float32), jnp.zeros((B, HID), jnp.float32))
        (h_last, _), hs = jax.lax.scan(step, init, jnp.transpose(inputs, (1, 0, 2)))
        return jnp.transpose(hs, (1, 0, 2)), h_last

    h1_seq, _ = run_layer(emb, params["wih_l0"], params["whh_l0"],
                          params["bih_l0"], params["bhh_l0"])
    _, h2_last = run_layer(h1_seq, params["wih_l1"], params["whh_l1"],
                           params["bih_l1"], params["bhh_l1"])
    return h2_last @ params["fc_w"].T + params["fc_b"]


# ---------------- deterministic params & run ----------------
def make_params(key):
    ks = jax.random.split(key, 11)
    s = 0.1
    return {
        "emb":    jax.random.normal(ks[0], (VOCAB, EMB), jnp.float32) * s,
        "wih_l0": jax.random.normal(ks[1], (4 * HID, EMB), jnp.float32) * s,
        "whh_l0": jax.random.normal(ks[2], (4 * HID, HID), jnp.float32) * s,
        "bih_l0": jax.random.normal(ks[3], (4 * HID,), jnp.float32) * s,
        "bhh_l0": jax.random.normal(ks[4], (4 * HID,), jnp.float32) * s,
        "wih_l1": jax.random.normal(ks[5], (4 * HID, HID), jnp.float32) * s,
        "whh_l1": jax.random.normal(ks[6], (4 * HID, HID), jnp.float32) * s,
        "bih_l1": jax.random.normal(ks[7], (4 * HID,), jnp.float32) * s,
        "bhh_l1": jax.random.normal(ks[8], (4 * HID,), jnp.float32) * s,
        "fc_w":   jax.random.normal(ks[9], (OUT, HID), jnp.float32) * s,
        "fc_b":   jax.random.normal(ks[10], (OUT,), jnp.float32) * s,
    }


if __name__ == "__main__":
    key = jax.random.PRNGKey(0)
    pkey, xkey = jax.random.split(key)
    params = make_params(pkey)
    x_ids = jax.random.randint(xkey, (B, T), 0, VOCAB, dtype=jnp.int32)

    out = jax.block_until_ready(nextchar_lstm_forward(x_ids, params))
    ref = jax.block_until_ready(reference_forward(x_ids, params))

    assert out.shape == (B, OUT)
    assert jnp.allclose(out, ref, atol=1e-2, rtol=1e-2), "mismatch vs JAX reference"
    print("KERNEL_OK")
</pallas_src>

<mosaic_0001>
module attributes {stable_mosaic.version = 11 : i64} {
  func.func @_nextchar_lstm_kernel(%arg0: i32, %arg1: memref<16x32xbf16, #tpu.memory_space<vmem>>, %arg2: memref<176x128xbf16, #tpu.memory_space<vmem>>, %arg3: memref<2x32xf32, #tpu.memory_space<vmem>>) attributes {dimension_semantics = [#tpu.dimension_semantics<arbitrary>], iteration_bounds = array<i64: 1>, scalar_prefetch = 0 : i64, scratch_operands = 0 : i64, tpu.core_type = #tpu.core_type<tc>, window_params = [{pipeline_mode = #tpu.pipeline_mode<synchronous>, transform_indices = @transform_0, window_bounds = array<i64: 16, 32>}, {pipeline_mode = #tpu.pipeline_mode<synchronous>, transform_indices = @transform_1, window_bounds = array<i64: 176, 128>}, {pipeline_mode = #tpu.pipeline_mode<synchronous>, transform_indices = @transform_2, window_bounds = array<i64: 2, 32>}]} {
    %c0 = arith.constant 0 : index
    %c0_0 = arith.constant 0 : index
    %0 = vector.load %arg2[%c0, %c0_0] : memref<176x128xbf16, #tpu.memory_space<vmem>>, vector<32x128xbf16>
    %c32 = arith.constant 32 : index
    %c0_1 = arith.constant 0 : index
    %1 = vector.load %arg2[%c32, %c0_1] : memref<176x128xbf16, #tpu.memory_space<vmem>>, vector<32x128xbf16>
    %c64 = arith.constant 64 : index
    %c0_2 = arith.constant 0 : index
    %2 = vector.load %arg2[%c64, %c0_2] : memref<176x128xbf16, #tpu.memory_space<vmem>>, vector<64x128xbf16>
    %c128 = arith.constant 128 : index
    %c0_3 = arith.constant 0 : index
    %3 = vector.load %arg2[%c128, %c0_3] : memref<176x128xbf16, #tpu.memory_space<vmem>>, vector<32x128xbf16>
    %c160 = arith.constant 160 : index
    %c0_4 = arith.constant 0 : index
    %4 = vector.load %arg2[%c160, %c0_4] : memref<176x128xbf16, #tpu.memory_space<vmem>>, vector<16x128xbf16>
    %5 = arith.extf %4 : vector<16x128xbf16> to vector<16x128xf32>
    %6 = vector.extract_strided_slice %5 {offsets = [0, 0], sizes = [1, 128], strides = [1, 1]} : vector<16x128xf32> to vector<1x128xf32>
    %7 = vector.extract_strided_slice %5 {offsets = [1, 0], sizes = [1, 128], strides = [1, 1]} : vector<16x128xf32> to vector<1x128xf32>
    %c0_5 = arith.constant 0 : index
    %c0_6 = arith.constant 0 : index
    %8 = vector.load %arg1[%c0_5, %c0_6] : memref<16x32xbf16, #tpu.memory_space<vmem>>, vector<16x32xbf16>
    %cst = arith.constant dense<0.000000e+00> : vector<16x128xf32>
    %9 = tpu.matmul %8, %0, %cst {dimension_numbers = #tpu.dot_dimension_numbers<[1], [0], [0], [1], [0, 0, 1, 1], [], []>} : vector<16x32xbf16>, vector<32x128xbf16>, vector<16x128xf32> -> vector<16x128xf32>
    %cst_7 = arith.constant 0.000000e+00 : f32
    %10 = vector.broadcast %cst_7 : f32 to vector<2x32xf32>
    %cst_8 = arith.constant 0.000000e+00 : f32
    %11 = vector.broadcast %cst_8 : f32 to vector<2x32xf32>
    %cst_9 = arith.constant 0.000000e+00 : f32
    %12 = vector.broadcast %cst_9 : f32 to vector<2x32xf32>
    %cst_10 = arith.constant 0.000000e+00 : f32
    %13 = vector.broadcast %cst_10 : f32 to vector<2x32xf32>
    %14 = vector.extract_strided_slice %9 {offsets = [0, 0], sizes = [2, 128], strides = [1, 1]} : vector<16x128xf32> to vector<2x128xf32>
    %15 = arith.truncf %10 : vector<2x32xf32> to vector<2x32xbf16>
    %cst_11 = arith.constant dense<0.000000e+00> : vector<2x128xf32>
    %16 = tpu.matmul %15, %1, %cst_11 {dimension_numbers = #tpu.dot_dimension_numbers<[1], [0], [0], [1], [0, 0, 1, 1], [], []>} : vector<2x32xbf16>, vector<32x128xbf16>, vector<2x128xf32> -> vector<2x128xf32>
    %17 = arith.addf %14, %16 : vector<2x128xf32>
    %18 = vector.extract_strided_slice %17 {offsets = [0, 0], sizes = [2, 96], strides = [1, 1]} : vector<2x128xf32> to vector<2x96xf32>
    %19 = arith.negf %18 : vector<2x96xf32>
    %20 = math.exp %19 : vector<2x96xf32>
    %cst_12 = arith.constant 1.000000e+00 : f32
    %21 = vector.broadcast %cst_12 : f32 to vector<2x96xf32>
    %22 = arith.addf %21, %20 : vector<2x96xf32>
    %23 = arith.divf %21, %22 : vector<2x96xf32>
    %24 = vector.extract_strided_slice %23 {offsets = [0, 0], sizes = [2, 32], strides = [1, 1]} : vector<2x96xf32> to vector<2x32xf32>
    %25 = vector.extract_strided_slice %23 {offsets = [0, 32], sizes = [2, 32], strides = [1, 1]} : vector<2x96xf32> to vector<2x32xf32>
    %26 = vector.extract_strided_slice %23 {offsets = [0, 64], sizes = [2, 32], strides = [1, 1]} : vector<2x96xf32> to vector<2x32xf32>
    %27 = vector.extract_strided_slice %17 {offsets = [0, 96], sizes = [2, 32], strides = [1, 1]} : vector<2x128xf32> to vector<2x32xf32>
    %28 = math.tanh %27 : vector<2x32xf32>
    %29 = arith.mulf %25, %11 : vector<2x32xf32>
    %30 = arith.mulf %24, %28 : vector<2x32xf32>
    %31 = arith.addf %29, %30 : vector<2x32xf32>
    %32 = math.tanh %31 : vector<2x32xf32>
    %33 = arith.mulf %26, %32 : vector<2x32xf32>
    %34 = tpu.concatenate %33, %12 in 1 : vector<2x32xf32>, vector<2x32xf32> -> vector<2x64xf32>
    %35 = arith.truncf %34 : vector<2x64xf32> to vector<2x64xbf16>
    %cst_13 = arith.constant dense<0.000000e+00> : vector<2x128xf32>
    %36 = tpu.matmul %35, %2, %cst_13 {dimension_numbers = #tpu.dot_dimension_numbers<[1], [0], [0], [1], [0, 0, 1, 1], [], []>} : vector<2x64xbf16>, vector<64x128xbf16>, vector<2x128xf32> -> vector<2x128xf32>
    %37 = vector.broadcast %6 : vector<1x128xf32> to vector<2x128xf32>
    %38 = arith.addf %36, %37 : vector<2x128xf32>
    %39 = vector.extract_strided_slice %38 {offsets = [0, 0], sizes = [2, 96], strides = [1, 1]} : vector<2x128xf32> to vector<2x96xf32>
    %40 = arith.negf %39 : vector<2x96xf32>
    %41 = math.exp %40 : vector<2x96xf32>
    %cst_14 = arith.constant 1.000000e+00 : f32
    %42 = vector.broadcast %cst_14 : f32 to vector<2x96xf32>
    %43 = arith.addf %42, %41 : vector<2x96xf32>
    %44 = arith.divf %42, %43 : vector<2x96xf32>
    %45 = vector.extract_strided_slice %44 {offsets = [0, 0], sizes = [2, 32], strides = [1, 1]} : vector<2x96xf32> to vector<2x32xf32>
    %46 = vector.extract_strided_slice %44 {offsets = [0, 32], sizes = [2, 32], strides = [1, 1]} : vector<2x96xf32> to vector<2x32xf32>
    %47 = vector.extract_strided_slice %44 {offsets = [0, 64], sizes = [2, 32], strides = [1, 1]} : vector<2x96xf32> to vector<2x32xf32>
    %48 = vector.extract_strided_slice %38 {offsets = [0, 96], sizes = [2, 32], strides = [1, 1]} : vector<2x128xf32> to vector<2x32xf32>
    %49 = math.tanh %48 : vector<2x32xf32>
    %50 = arith.mulf %46, %13 : vector<2x32xf32>
    %51 = arith.mulf %45, %49 : vector<2x32xf32>
    %52 = arith.addf %50, %51 : vector<2x32xf32>
    %53 = math.tanh %52 : vector<2x32xf32>
    %54 = arith.mulf %47, %53 : vector<2x32xf32>
    %55 = vector.extract_strided_slice %9 {offsets = [2, 0], sizes = [2, 128], strides = [1, 1]} : vector<16x128xf32> to vector<2x128xf32>
    %56 = arith.truncf %33 : vector<2x32xf32> to vector<2x32xbf16>
    %cst_15 = arith.constant dense<0.000000e+00> : vector<2x128xf32>
    %57 = tpu.matmul %56, %1, %cst_15 {dimension_numbers = #tpu.dot_dimension_numbers<[1], [0], [0], [1], [0, 0, 1, 1], [], []>} : vector<2x32xbf16>, vector<32x128xbf16>, vector<2x128xf32> -> vector<2x128xf32>
    %58 = arith.addf %55, %57 : vector<2x128xf32>
    %59 = vector.extract_strided_slice %58 {offsets = [0, 0], sizes = [2, 96], strides = [1, 1]} : vector<2x128xf32> to vector<2x96xf32>
    %60 = arith.negf %59 : vector<2x96xf32>
    %61 = math.exp %60 : vector<2x96xf32>
    %cst_16 = arith.constant 1.000000e+00 : f32
    %62 = vector.broadcast %cst_16 : f32 to vector<2x96xf32>
    %63 = arith.addf %62, %61 : vector<2x96xf32>
    %64 = arith.divf %62, %63 : vector<2x96xf32>
    %65 = vector.extract_strided_slice %64 {offsets = [0, 0], sizes = [2, 32], strides = [1, 1]} : vector<2x96xf32> to vector<2x32xf32>
    %66 = vector.extract_strided_slice %64 {offsets = [0, 32], sizes = [2, 32], strides = [1, 1]} : vector<2x96xf32> to vector<2x32xf32>
    %67 = vector.extract_strided_slice %64 {offsets = [0, 64], sizes = [2, 32], strides = [1, 1]} : vector<2x96xf32> to vector<2x32xf32>
    %68 = vector.extract_strided_slice %58 {offsets = [0, 96], sizes = [2, 32], strides = [1, 1]} : vector<2x128xf32> to vector<2x32xf32>
    %69 = math.tanh %68 : vector<2x32xf32>
    %70 = arith.mulf %66, %31 : vector<2x32xf32>
    %71 = arith.mulf %65, %69 : vector<2x32xf32>
    %72 = arith.addf %70, %71 : vector<2x32xf32>
    %73 = math.tanh %72 : vector<2x32xf32>
    %74 = arith.mulf %67, %73 : vector<2x32xf32>
    %75 = tpu.concatenate %74, %54 in 1 : vector<2x32xf32>, vector<2x32xf32> -> vector<2x64xf32>
    %76 = arith.truncf %75 : vector<2x64xf32> to vector<2x64xbf16>
    %cst_17 = arith.constant dense<0.000000e+00> : vector<2x128xf32>
    %77 = tpu.matmul %76, %2, %cst_17 {dimension_numbers = #tpu.dot_dimension_numbers<[1], [0], [0], [1], [0, 0, 1, 1], [], []>} : vector<2x64xbf16>, vector<64x128xbf16>, vector<2x128xf32> -> vector<2x128xf32>
    %78 = vector.broadcast %6 : vector<1x128xf32> to vector<2x128xf32>
    %79 = arith.addf %77, %78 : vector<2x128xf32>
    %80 = vector.extract_strided_slice %79 {offsets = [0, 0], sizes = [2, 96], strides = [1, 1]} : vector<2x128xf32> to vector<2x96xf32>
    %81 = arith.negf %80 : vector<2x96xf32>
    %82 = math.exp %81 : vector<2x96xf32>
    %cst_18 = arith.constant 1.000000e+00 : f32
    %83 = vector.broadcast %cst_18 : f32 to vector<2x96xf32>
    %84 = arith.addf %83, %82 : vector<2x96xf32>
    %85 = arith.divf %83, %84 : vector<2x96xf32>
    %86 = vector.extract_strided_slice %85 {offsets = [0, 0], sizes = [2, 32], strides = [1, 1]} : vector<2x96xf32> to vector<2x32xf32>
    %87 = vector.extract_strided_slice %85 {offsets = [0, 32], sizes = [2, 32], strides = [1, 1]} : vector<2x96xf32> to vector<2x32xf32>
    %88 = vector.extract_strided_slice %85 {offsets = [0, 64], sizes = [2, 32], strides = [1, 1]} : vector<2x96xf32> to vector<2x32xf32>
    %89 = vector.extract_strided_slice %79 {offsets = [0, 96], sizes = [2, 32], strides = [1, 1]} : vector<2x128xf32> to vector<2x32xf32>
    %90 = math.tanh %89 : vector<2x32xf32>
    %91 = arith.mulf %87, %52 : vector<2x32xf32>
    %92 = arith.mulf %86, %90 : vector<2x32xf32>
    %93 = arith.addf %91, %92 : vector<2x32xf32>
    %94 = math.tanh %93 : vector<2x32xf32>
    %95 = arith.mulf %88, %94 : vector<2x32xf32>
    %96 = vector.extract_strided_slice %9 {offsets = [4, 0], sizes = [2, 128], strides = [1, 1]} : vector<16x128xf32> to vector<2x128xf32>
    %97 = arith.truncf %74 : vector<2x32xf32> to vector<2x32xbf16>
    %cst_19 = arith.constant dense<0.000000e+00> : vector<2x128xf32>
    %98 = tpu.matmul %97, %1, %cst_19 {dimension_numbers = #tpu.dot_dimension_numbers<[1], [0], [0], [1], [0, 0, 1, 1], [], []>} : vector<2x32xbf16>, vector<32x128xbf16>, vector<2x128xf32> -> vector<2x128xf32>
    %99 = arith.addf %96, %98 : vector<2x128xf32>
    %100 = vector.extract_strided_slice %99 {offsets = [0, 0], sizes = [2, 96], strides = [1, 1]} : vector<2x128xf32> to vector<2x96xf32>
    %101 = arith.negf %100 : vector<2x96xf32>
    %102 = math.exp %101 : vector<2x96xf32>
    %cst_20 = arith.constant 1.000000e+00 : f32
    %103 = vector.broadcast %cst_20 : f32 to vector<2x96xf32>
    %104 = arith.addf %103, %102 : vector<2x96xf32>
    %105 = arith.divf %103, %104 : vector<2x96xf32>
    %106 = vector.extract_strided_slice %105 {offsets = [0, 0], sizes = [2, 32], strides = [1, 1]} : vector<2x96xf32> to vector<2x32xf32>
    %107 = vector.extract_strided_slice %105 {offsets = [0, 32], sizes = [2, 32], strides = [1, 1]} : vector<2x96xf32> to vector<2x32xf32>
    %108 = vector.extract_strided_slice %105 {offsets = [0, 64], sizes = [2, 32], strides = [1, 1]} : vector<2x96xf32> to vector<2x32xf32>
    %109 = vector.extract_strided_slice %99 {offsets = [0, 96], sizes = [2, 32], strides = [1, 1]} : vector<2x128xf32> to vector<2x32xf32>
    %110 = math.tanh %109 : vector<2x32xf32>
    %111 = arith.mulf %107, %72 : vector<2x32xf32>
    %112 = arith.mulf %106, %110 : vector<2x32xf32>
    %113 = arith.addf %111, %112 : vector<2x32xf32>
    %114 = math.tanh %113 : vector<2x32xf32>
    %115 = arith.mulf %108, %114 : vector<2x32xf32>
    %116 = tpu.concatenate %115, %95 in 1 : vector<2x32xf32>, vector<2x32xf32> -> vector<2x64xf32>
    %117 = arith.truncf %116 : vector<2x64xf32> to vector<2x64xbf16>
    %cst_21 = arith.constant dense<0.000000e+00> : vector<2x128xf32>
    %118 = tpu.matmul %117, %2, %cst_21 {dimension_numbers = #tpu.dot_dimension_numbers<[1], [0], [0], [1], [0, 0, 1, 1], [], []>} : vector<2x64xbf16>, vector<64x128xbf16>, vector<2x128xf32> -> vector<2x128xf32>
    %119 = vector.broadcast %6 : vector<1x128xf32> to vector<2x128xf32>
    %120 = arith.addf %118, %119 : vector<2x128xf32>
    %121 = vector.extract_strided_slice %120 {offsets = [0, 0], sizes = [2, 96], strides = [1, 1]} : vector<2x128xf32> to vector<2x96xf32>
    %122 = arith.negf %121 : vector<2x96xf32>
    %123 = math.exp %122 : vector<2x96xf32>
    %cst_22 = arith.constant 1.000000e+00 : f32
    %124 = vector.broadcast %cst_22 : f32 to vector<2x96xf32>
    %125 = arith.addf %124, %123 : vector<2x96xf32>
    %126 = arith.divf %124, %125 : vector<2x96xf32>
    %127 = vector.extract_strided_slice %126 {offsets = [0, 0], sizes = [2, 32], strides = [1, 1]} : vector<2x96xf32> to vector<2x32xf32>
    %128 = vector.extract_strided_slice %126 {offsets = [0, 32], sizes = [2, 32], strides = [1, 1]} : vector<2x96xf32> to vector<2x32xf32>
    %129 = vector.extract_strided_slice %126 {offsets = [0, 64], sizes = [2, 32], strides = [1, 1]} : vector<2x96xf32> to vector<2x32xf32>
    %130 = vector.extract_strided_slice %120 {offsets = [0, 96], sizes = [2, 32], strides = [1, 1]} : vector<2x128xf32> to vector<2x32xf32>
    %131 = math.tanh %130 : vector<2x32xf32>
    %132 = arith.mulf %128, %93 : vector<2x32xf32>
    %133 = arith.mulf %127, %131 : vector<2x32xf32>
    %134 = arith.addf %132, %133 : vector<2x32xf32>
    %135 = math.tanh %134 : vector<2x32xf32>
    %136 = arith.mulf %129, %135 : vector<2x32xf32>
    %137 = vector.extract_strided_slice %9 {offsets = [6, 0], sizes = [2, 128], strides = [1, 1]} : vector<16x128xf32> to vector<2x128xf32>
    %138 = arith.truncf %115 : vector<2x32xf32> to vector<2x32xbf16>
    %cst_23 = arith.constant dense<0.000000e+00> : vector<2x128xf32>
    %139 = tpu.matmul %138, %1, %cst_23 {dimension_numbers = #tpu.dot_dimension_numbers<[1], [0], [0], [1], [0, 0, 1, 1], [], []>} : vector<2x32xbf16>, vector<32x128xbf16>, vector<2x128xf32> -> vector<2x128xf32>
    %140 = arith.addf %137, %139 : vector<2x128xf32>
    %141 = vector.extract_strided_slice %140 {offsets = [0, 0], sizes = [2, 96], strides = [1, 1]} : vector<2x128xf32> to vector<2x96xf32>
    %142 = arith.negf %141 : vector<2x96xf32>
    %143 = math.exp %142 : vector<2x96xf32>
    %cst_24 = arith.constant 1.000000e+00 : f32
    %144 = vector.broadcast %cst_24 : f32 to vector<2x96xf32>
    %145 = arith.addf %144, %143 : vector<2x96xf32>
    %146 = arith.divf %144, %145 : vector<2x96xf32>
    %147 = vector.extract_strided_slice %146 {offsets = [0, 0], sizes = [2, 32], strides = [1, 1]} : vector<2x96xf32> to vector<2x32xf32>
    %148 = vector.extract_strided_slice %146 {offsets = [0, 32], sizes = [2, 32], strides = [1, 1]} : vector<2x96xf32> to vector<2x32xf32>
    %149 = vector.extract_strided_slice %146 {offsets = [0, 64], sizes = [2, 32], strides = [1, 1]} : vector<2x96xf32> to vector<2x32xf32>
    %150 = vector.extract_strided_slice %140 {offsets = [0, 96], sizes = [2, 32], strides = [1, 1]} : vector<2x128xf32> to vector<2x32xf32>
    %151 = math.tanh %150 : vector<2x32xf32>
    %152 = arith.mulf %148, %113 : vector<2x32xf32>
    %153 = arith.mulf %147, %151 : vector<2x32xf32>
    %154 = arith.addf %152, %153 : vector<2x32xf32>
    %155 = math.tanh %154 : vector<2x32xf32>
    %156 = arith.mulf %149, %155 : vector<2x32xf32>
    %157 = tpu.concatenate %156, %136 in 1 : vector<2x32xf32>, vector<2x32xf32> -> vector<2x64xf32>
    %158 = arith.truncf %157 : vector<2x64xf32> to vector<2x64xbf16>
    %cst_25 = arith.constant dense<0.000000e+00> : vector<2x128xf32>
    %159 = tpu.matmul %158, %2, %cst_25 {dimension_numbers = #tpu.dot_dimension_numbers<[1], [0], [0], [1], [0, 0, 1, 1], [], []>} : vector<2x64xbf16>, vector<64x128xbf16>, vector<2x128xf32> -> vector<2x128xf32>
    %160 = vector.broadcast %6 : vector<1x128xf32> to vector<2x128xf32>
    %161 = arith.addf %159, %160 : vector<2x128xf32>
    %162 = vector.extract_strided_slice %161 {offsets = [0, 0], sizes = [2, 96], strides = [1, 1]} : vector<2x128xf32> to vector<2x96xf32>
    %163 = arith.negf %162 : vector<2x96xf32>
    %164 = math.exp %163 : vector<2x96xf32>
    %cst_26 = arith.constant 1.000000e+00 : f32
    %165 = vector.broadcast %cst_26 : f32 to vector<2x96xf32>
    %166 = arith.addf %165, %164 : vector<2x96xf32>
    %167 = arith.divf %165, %166 : vector<2x96xf32>
    %168 = vector.extract_strided_slice %167 {offsets = [0, 0], sizes = [2, 32], strides = [1, 1]} : vector<2x96xf32> to vector<2x32xf32>
    %169 = vector.extract_strided_slice %167 {offsets = [0, 32], sizes = [2, 32], strides = [1, 1]} : vector<2x96xf32> to vector<2x32xf32>
    %170 = vector.extract_strided_slice %167 {offsets = [0, 64], sizes = [2, 32], strides = [1, 1]} : vector<2x96xf32> to vector<2x32xf32>
    %171 = vector.extract_strided_slice %161 {offsets = [0, 96], sizes = [2, 32], strides = [1, 1]} : vector<2x128xf32> to vector<2x32xf32>
    %172 = math.tanh %171 : vector<2x32xf32>
    %173 = arith.mulf %169, %134 : vector<2x32xf32>
    %174 = arith.mulf %168, %172 : vector<2x32xf32>
    %175 = arith.addf %173, %174 : vector<2x32xf32>
    %176 = math.tanh %175 : vector<2x32xf32>
    %177 = arith.mulf %170, %176 : vector<2x32xf32>
    %178 = vector.extract_strided_slice %9 {offsets = [8, 0], sizes = [2, 128], strides = [1, 1]} : vector<16x128xf32> to vector<2x128xf32>
    %179 = arith.truncf %156 : vector<2x32xf32> to vector<2x32xbf16>
    %cst_27 = arith.constant dense<0.000000e+00> : vector<2x128xf32>
    %180 = tpu.matmul %179, %1, %cst_27 {dimension_numbers = #tpu.dot_dimension_numbers<[1], [0], [0], [1], [0, 0, 1, 1], [], []>} : vector<2x32xbf16>, vector<32x128xbf16>, vector<2x128xf32> -> vector<2x128xf32>
    %181 = arith.addf %178, %180 : vector<2x128xf32>
    %182 = vector.extract_strided_slice %181 {offsets = [0, 0], sizes = [2, 96], strides = [1, 1]} : vector<2x128xf32> to vector<2x96xf32>
    %183 = arith.negf %182 : vector<2x96xf32>
    %184 = math.exp %183 : vector<2x96xf32>
    %cst_28 = arith.constant 1.000000e+00 : f32
    %185 = vector.broadcast %cst_28 : f32 to vector<2x96xf32>
    %186 = arith.addf %185, %184 : vector<2x96xf32>
    %187 = arith.divf %185, %186 : vector<2x96xf32>
    %188 = vector.extract_strided_slice %187 {offsets = [0, 0], sizes = [2, 32], strides = [1, 1]} : vector<2x96xf32> to vector<2x32xf32>
    %189 = vector.extract_strided_slice %187 {offsets = [0, 32], sizes = [2, 32], strides = [1, 1]} : vector<2x96xf32> to vector<2x32xf32>
    %190 = vector.extract_strided_slice %187 {offsets = [0, 64], sizes = [2, 32], strides = [1, 1]} : vector<2x96xf32> to vector<2x32xf32>
    %191 = vector.extract_strided_slice %181 {offsets = [0, 96], sizes = [2, 32], strides = [1, 1]} : vector<2x128xf32> to vector<2x32xf32>
    %192 = math.tanh %191 : vector<2x32xf32>
    %193 = arith.mulf %189, %154 : vector<2x32xf32>
    %194 = arith.mulf %188, %192 : vector<2x32xf32>
    %195 = arith.addf %193, %194 : vector<2x32xf32>
    %196 = math.tanh %195 : vector<2x32xf32>
    %197 = arith.mulf %190, %196 : vector<2x32xf32>
    %198 = tpu.concatenate %197, %177 in 1 : vector<2x32xf32>, vector<2x32xf32> -> vector<2x64xf32>
    %199 = arith.truncf %198 : vector<2x64xf32> to vector<2x64xbf16>
    %cst_29 = arith.constant dense<0.000000e+00> : vector<2x128xf32>
    %200 = tpu.matmul %199, %2, %cst_29 {dimension_numbers = #tpu.dot_dimension_numbers<[1], [0], [0], [1], [0, 0, 1, 1], [], []>} : vector<2x64xbf16>, vector<64x128xbf16>, vector<2x128xf32> -> vector<2x128xf32>
    %201 = vector.broadcast %6 : vector<1x128xf32> to vector<2x128xf32>
    %202 = arith.addf %200, %201 : vector<2x128xf32>
    %203 = vector.extract_strided_slice %202 {offsets = [0, 0], sizes = [2, 96], strides = [1, 1]} : vector<2x128xf32> to vector<2x96xf32>
    %204 = arith.negf %203 : vector<2x96xf32>
    %205 = math.exp %204 : vector<2x96xf32>
    %cst_30 = arith.constant 1.000000e+00 : f32
    %206 = vector.broadcast %cst_30 : f32 to vector<2x96xf32>
    %207 = arith.addf %206, %205 : vector<2x96xf32>
    %208 = arith.divf %206, %207 : vector<2x96xf32>
    %209 = vector.extract_strided_slice %208 {offsets = [0, 0], sizes = [2, 32], strides = [1, 1]} : vector<2x96xf32> to vector<2x32xf32>
    %210 = vector.extract_strided_slice %208 {offsets = [0, 32], sizes = [2, 32], strides = [1, 1]} : vector<2x96xf32> to vector<2x32xf32>
    %211 = vector.extract_strided_slice %208 {offsets = [0, 64], sizes = [2, 32], strides = [1, 1]} : vector<2x96xf32> to vector<2x32xf32>
    %212 = vector.extract_strided_slice %202 {offsets = [0, 96], sizes = [2, 32], strides = [1, 1]} : vector<2x128xf32> to vector<2x32xf32>
    %213 = math.tanh %212 : vector<2x32xf32>
    %214 = arith.mulf %210, %175 : vector<2x32xf32>
    %215 = arith.mulf %209, %213 : vector<2x32xf32>
    %216 = arith.addf %214, %215 : vector<2x32xf32>
    %217 = math.tanh %216 : vector<2x32xf32>
    %218 = arith.mulf %211, %217 : vector<2x32xf32>
    %219 = vector.extract_strided_slice %9 {offsets = [10, 0], sizes = [2, 128], strides = [1, 1]} : vector<16x128xf32> to vector<2x128xf32>
    %220 = arith.truncf %197 : vector<2x32xf32> to vector<2x32xbf16>
    %cst_31 = arith.constant dense<0.000000e+00> : vector<2x128xf32>
    %221 = tpu.matmul %220, %1, %cst_31 {dimension_numbers = #tpu.dot_dimension_numbers<[1], [0], [0], [1], [0, 0, 1, 1], [], []>} : vector<2x32xbf16>, vector<32x128xbf16>, vector<2x128xf32> -> vector<2x128xf32>
    %222 = arith.addf %219, %221 : vector<2x128xf32>
    %223 = vector.extract_strided_slice %222 {offsets = [0, 0], sizes = [2, 96], strides = [1, 1]} : vector<2x128xf32> to vector<2x96xf32>
    %224 = arith.negf %223 : vector<2x96xf32>
    %225 = math.exp %224 : vector<2x96xf32>
    %cst_32 = arith.constant 1.000000e+00 : f32
    %226 = vector.broadcast %cst_32 : f32 to vector<2x96xf32>
    %227 = arith.addf %226, %225 : vector<2x96xf32>
    %228 = arith.divf %226, %227 : vector<2x96xf32>
    %229 = vector.extract_strided_slice %228 {offsets = [0, 0], sizes = [2, 32], strides = [1, 1]} : vector<2x96xf32> to vector<2x32xf32>
    %230 = vector.extract_strided_slice %228 {offsets = [0, 32], sizes = [2, 32], strides = [1, 1]} : vector<2x96xf32> to vector<2x32xf32>
    %231 = vector.extract_strided_slice %228 {offsets = [0, 64], sizes = [2, 32], strides = [1, 1]} : vector<2x96xf32> to vector<2x32xf32>
    %232 = vector.extract_strided_slice %222 {offsets = [0, 96], sizes = [2, 32], strides = [1, 1]} : vector<2x128xf32> to vector<2x32xf32>
    %233 = math.tanh %232 : vector<2x32xf32>
    %234 = arith.mulf %230, %195 : vector<2x32xf32>
    %235 = arith.mulf %229, %233 : vector<2x32xf32>
    %236 = arith.addf %234, %235 : vector<2x32xf32>
    %237 = math.tanh %236 : vector<2x32xf32>
    %238 = arith.mulf %231, %237 : vector<2x32xf32>
    %239 = tpu.concatenate %238, %218 in 1 : vector<2x32xf32>, vector<2x32xf32> -> vector<2x64xf32>
    %240 = arith.truncf %239 : vector<2x64xf32> to vector<2x64xbf16>
    %cst_33 = arith.constant dense<0.000000e+00> : vector<2x128xf32>
    %241 = tpu.matmul %240, %2, %cst_33 {dimension_numbers = #tpu.dot_dimension_numbers<[1], [0], [0], [1], [0, 0, 1, 1], [], []>} : vector<2x64xbf16>, vector<64x128xbf16>, vector<2x128xf32> -> vector<2x128xf32>
    %242 = vector.broadcast %6 : vector<1x128xf32> to vector<2x128xf32>
    %243 = arith.addf %241, %242 : vector<2x128xf32>
    %244 = vector.extract_strided_slice %243 {offsets = [0, 0], sizes = [2, 96], strides = [1, 1]} : vector<2x128xf32> to vector<2x96xf32>
    %245 = arith.negf %244 : vector<2x96xf32>
    %246 = math.exp %245 : vector<2x96xf32>
    %cst_34 = arith.constant 1.000000e+00 : f32
    %247 = vector.broadcast %cst_34 : f32 to vector<2x96xf32>
    %248 = arith.addf %247, %246 : vector<2x96xf32>
    %249 = arith.divf %247, %248 : vector<2x96xf32>
    %250 = vector.extract_strided_slice %249 {offsets = [0, 0], sizes = [2, 32], strides = [1, 1]} : vector<2x96xf32> to vector<2x32xf32>
    %251 = vector.extract_strided_slice %249 {offsets = [0, 32], sizes = [2, 32], strides = [1, 1]} : vector<2x96xf32> to vector<2x32xf32>
    %252 = vector.extract_strided_slice %249 {offsets = [0, 64], sizes = [2, 32], strides = [1, 1]} : vector<2x96xf32> to vector<2x32xf32>
    %253 = vector.extract_strided_slice %243 {offsets = [0, 96], sizes = [2, 32], strides = [1, 1]} : vector<2x128xf32> to vector<2x32xf32>
    %254 = math.tanh %253 : vector<2x32xf32>
    %255 = arith.mulf %251, %216 : vector<2x32xf32>
    %256 = arith.mulf %250, %254 : vector<2x32xf32>
    %257 = arith.addf %255, %256 : vector<2x32xf32>
    %258 = math.tanh %257 : vector<2x32xf32>
    %259 = arith.mulf %252, %258 : vector<2x32xf32>
    %260 = vector.extract_strided_slice %9 {offsets = [12, 0], sizes = [2, 128], strides = [1, 1]} : vector<16x128xf32> to vector<2x128xf32>
    %261 = arith.truncf %238 : vector<2x32xf32> to vector<2x32xbf16>
    %cst_35 = arith.constant dense<0.000000e+00> : vector<2x128xf32>
    %262 = tpu.matmul %261, %1, %cst_35 {dimension_numbers = #tpu.dot_dimension_numbers<[1], [0], [0], [1], [0, 0, 1, 1], [], []>} : vector<2x32xbf16>, vector<32x128xbf16>, vector<2x128xf32> -> vector<2x128xf32>
    %263 = arith.addf %260, %262 : vector<2x128xf32>
    %264 = vector.extract_strided_slice %263 {offsets = [0, 0], sizes = [2, 96], strides = [1, 1]} : vector<2x128xf32> to vector<2x96xf32>
    %265 = arith.negf %264 : vector<2x96xf32>
    %266 = math.exp %265 : vector<2x96xf32>
    %cst_36 = arith.constant 1.000000e+00 : f32
    %267 = vector.broadcast %cst_36 : f32 to vector<2x96xf32>
    %268 = arith.addf %267, %266 : vector<2x96xf32>
    %269 = arith.divf %267, %268 : vector<2x96xf32>
    %270 = vector.extract_strided_slice %269 {offsets = [0, 0], sizes = [2, 32], strides = [1, 1]} : vector<2x96xf32> to vector<2x32xf32>
    %271 = vector.extract_strided_slice %269 {offsets = [0, 32], sizes = [2, 32], strides = [1, 1]} : vector<2x96xf32> to vector<2x32xf32>
    %272 = vector.extract_strided_slice %269 {offsets = [0, 64], sizes = [2, 32], strides = [1, 1]} : vector<2x96xf32> to vector<2x32xf32>
    %273 = vector.extract_strided_slice %263 {offsets = [0, 96], sizes = [2, 32], strides = [1, 1]} : vector<2x128xf32> to vector<2x32xf32>
    %274 = math.tanh %273 : vector<2x32xf32>
    %275 = arith.mulf %271, %236 : vector<2x32xf32>
    %276 = arith.mulf %270, %274 : vector<2x32xf32>
    %277 = arith.addf %275, %276 : vector<2x32xf32>
    %278 = math.tanh %277 : vector<2x32xf32>
    %279 = arith.mulf %272, %278 : vector<2x32xf32>
    %280 = tpu.concatenate %279, %259 in 1 : vector<2x32xf32>, vector<2x32xf32> -> vector<2x64xf32>
    %281 = arith.truncf %280 : vector<2x64xf32> to vector<2x64xbf16>
    %cst_37 = arith.constant dense<0.000000e+00> : vector<2x128xf32>
    %282 = tpu.matmul %281, %2, %cst_37 {dimension_numbers = #tpu.dot_dimension_numbers<[1], [0], [0], [1], [0, 0, 1, 1], [], []>} : vector<2x64xbf16>, vector<64x128xbf16>, vector<2x128xf32> -> vector<2x128xf32>
    %283 = vector.broadcast %6 : vector<1x128xf32> to vector<2x128xf32>
    %284 = arith.addf %282, %283 : vector<2x128xf32>
    %285 = vector.extract_strided_slice %284 {offsets = [0, 0], sizes = [2, 96], strides = [1, 1]} : vector<2x128xf32> to vector<2x96xf32>
    %286 = arith.negf %285 : vector<2x96xf32>
    %287 = math.exp %286 : vector<2x96xf32>
    %cst_38 = arith.constant 1.000000e+00 : f32
    %288 = vector.broadcast %cst_38 : f32 to vector<2x96xf32>
    %289 = arith.addf %288, %287 : vector<2x96xf32>
    %290 = arith.divf %288, %289 : vector<2x96xf32>
    %291 = vector.extract_strided_slice %290 {offsets = [0, 0], sizes = [2, 32], strides = [1, 1]} : vector<2x96xf32> to vector<2x32xf32>
    %292 = vector.extract_strided_slice %290 {offsets = [0, 32], sizes = [2, 32], strides = [1, 1]} : vector<2x96xf32> to vector<2x32xf32>
    %293 = vector.extract_strided_slice %290 {offsets = [0, 64], sizes = [2, 32], strides = [1, 1]} : vector<2x96xf32> to vector<2x32xf32>
    %294 = vector.extract_strided_slice %284 {offsets = [0, 96], sizes = [2, 32], strides = [1, 1]} : vector<2x128xf32> to vector<2x32xf32>
    %295 = math.tanh %294 : vector<2x32xf32>
    %296 = arith.mulf %292, %257 : vector<2x32xf32>
    %297 = arith.mulf %291, %295 : vector<2x32xf32>
    %298 = arith.addf %296, %297 : vector<2x32xf32>
    %299 = math.tanh %298 : vector<2x32xf32>
    %300 = arith.mulf %293, %299 : vector<2x32xf32>
    %301 = vector.extract_strided_slice %9 {offsets = [14, 0], sizes = [2, 128], strides = [1, 1]} : vector<16x128xf32> to vector<2x128xf32>
    %302 = arith.truncf %279 : vector<2x32xf32> to vector<2x32xbf16>
    %cst_39 = arith.constant dense<0.000000e+00> : vector<2x128xf32>
    %303 = tpu.matmul %302, %1, %cst_39 {dimension_numbers = #tpu.dot_dimension_numbers<[1], [0], [0], [1], [0, 0, 1, 1], [], []>} : vector<2x32xbf16>, vector<32x128xbf16>, vector<2x128xf32> -> vector<2x128xf32>
    %304 = arith.addf %301, %303 : vector<2x128xf32>
    %305 = vector.extract_strided_slice %304 {offsets = [0, 0], sizes = [2, 96], strides = [1, 1]} : vector<2x128xf32> to vector<2x96xf32>
    %306 = arith.negf %305 : vector<2x96xf32>
    %307 = math.exp %306 : vector<2x96xf32>
    %cst_40 = arith.constant 1.000000e+00 : f32
    %308 = vector.broadcast %cst_40 : f32 to vector<2x96xf32>
    %309 = arith.addf %308, %307 : vector<2x96xf32>
    %310 = arith.divf %308, %309 : vector<2x96xf32>
    %311 = vector.extract_strided_slice %310 {offsets = [0, 0], sizes = [2, 32], strides = [1, 1]} : vector<2x96xf32> to vector<2x32xf32>
    %312 = vector.extract_strided_slice %310 {offsets = [0, 32], sizes = [2, 32], strides = [1, 1]} : vector<2x96xf32> to vector<2x32xf32>
    %313 = vector.extract_strided_slice %310 {offsets = [0, 64], sizes = [2, 32], strides = [1, 1]} : vector<2x96xf32> to vector<2x32xf32>
    %314 = vector.extract_strided_slice %304 {offsets = [0, 96], sizes = [2, 32], strides = [1, 1]} : vector<2x128xf32> to vector<2x32xf32>
    %315 = math.tanh %314 : vector<2x32xf32>
    %316 = arith.mulf %312, %277 : vector<2x32xf32>
    %317 = arith.mulf %311, %315 : vector<2x32xf32>
    %318 = arith.addf %316, %317 : vector<2x32xf32>
    %319 = math.tanh %318 : vector<2x32xf32>
    %320 = arith.mulf %313, %319 : vector<2x32xf32>
    %321 = tpu.concatenate %320, %300 in 1 : vector<2x32xf32>, vector<2x32xf32> -> vector<2x64xf32>
    %322 = arith.truncf %321 : vector<2x64xf32> to vector<2x64xbf16>
    %cst_41 = arith.constant dense<0.000000e+00> : vector<2x128xf32>
    %323 = tpu.matmul %322, %2, %cst_41 {dimension_numbers = #tpu.dot_dimension_numbers<[1], [0], [0], [1], [0, 0, 1, 1], [], []>} : vector<2x64xbf16>, vector<64x128xbf16>, vector<2x128xf32> -> vector<2x128xf32>
    %324 = vector.broadcast %6 : vector<1x128xf32> to vector<2x128xf32>
    %325 = arith.addf %323, %324 : vector<2x128xf32>
    %326 = vector.extract_strided_slice %325 {offsets = [0, 0], sizes = [2, 96], strides = [1, 1]} : vector<2x128xf32> to vector<2x96xf32>
    %327 = arith.negf %326 : vector<2x96xf32>
    %328 = math.exp %327 : vector<2x96xf32>
    %cst_42 = arith.constant 1.000000e+00 : f32
    %329 = vector.broadcast %cst_42 : f32 to vector<2x96xf32>
    %330 = arith.addf %329, %328 : vector<2x96xf32>
    %331 = arith.divf %329, %330 : vector<2x96xf32>
    %332 = vector.extract_strided_slice %331 {offsets = [0, 0], sizes = [2, 32], strides = [1, 1]} : vector<2x96xf32> to vector<2x32xf32>
    %333 = vector.extract_strided_slice %331 {offsets = [0, 32], sizes = [2, 32], strides = [1, 1]} : vector<2x96xf32> to vector<2x32xf32>
    %334 = vector.extract_strided_slice %331 {offsets = [0, 64], sizes = [2, 32], strides = [1, 1]} : vector<2x96xf32> to vector<2x32xf32>
    %335 = vector.extract_strided_slice %325 {offsets = [0, 96], sizes = [2, 32], strides = [1, 1]} : vector<2x128xf32> to vector<2x32xf32>
    %336 = math.tanh %335 : vector<2x32xf32>
    %337 = arith.mulf %333, %298 : vector<2x32xf32>
    %338 = arith.mulf %332, %336 : vector<2x32xf32>
    %339 = arith.addf %337, %338 : vector<2x32xf32>
    %340 = math.tanh %339 : vector<2x32xf32>
    %341 = arith.mulf %334, %340 : vector<2x32xf32>
    %342 = arith.truncf %341 : vector<2x32xf32> to vector<2x32xbf16>
    %cst_43 = arith.constant dense<0.000000e+00> : vector<2x128xf32>
    %343 = tpu.matmul %342, %3, %cst_43 {dimension_numbers = #tpu.dot_dimension_numbers<[1], [0], [0], [1], [0, 0, 1, 1], [], []>} : vector<2x32xbf16>, vector<32x128xbf16>, vector<2x128xf32> -> vector<2x128xf32>
    %344 = vector.broadcast %7 : vector<1x128xf32> to vector<2x128xf32>
    %345 = arith.addf %343, %344 : vector<2x128xf32>
    %346 = vector.extract_strided_slice %345 {offsets = [0, 0], sizes = [2, 32], strides = [1, 1]} : vector<2x128xf32> to vector<2x32xf32>
    %c0_44 = arith.constant 0 : index
    %c0_45 = arith.constant 0 : index
    %347 = vector.load %arg3[%c0_44, %c0_45] : memref<2x32xf32, #tpu.memory_space<vmem>>, vector<2x32xf32>
    tpu.vector_store %arg3[%c0_44, %c0_45], %346 {strides = array<i32>} : memref<2x32xf32, #tpu.memory_space<vmem>>, vector<2x32xf32>,
    return
  }
  func.func @transform_0(%arg0: i32) -> (i32, i32) {
    %c0_i32 = arith.constant 0 : i32
    %c0_i32_0 = arith.constant 0 : i32
    %c0_i32_1 = arith.constant 0 : i32
    return %c0_i32, %c0_i32_0 : i32, i32
  }
  func.func @transform_1(%arg0: i32) -> (i32, i32) {
    %c0_i32 = arith.constant 0 : i32
    %c0_i32_0 = arith.constant 0 : i32
    %c0_i32_1 = arith.constant 0 : i32
    return %c0_i32, %c0_i32_0 : i32, i32
  }
  func.func @transform_2(%arg0: i32) -> (i32, i32) {
    %c0_i32 = arith.constant 0 : i32
    %c0_i32_0 = arith.constant 0 : i32
    %c0_i32_1 = arith.constant 0 : i32
    return %c0_i32, %c0_i32_0 : i32, i32
  }
}

</mosaic_0001>

<llo_original>
// kernel: tpu_custom_call.1
$region0: #{tpu_custom_call.1}
  #allocation0 [shape = 'u32[]', space=smem, size = 0x4, offset = 0x4, fixed_abs, tag = 'smem constant byte address 0x4 - core index']
  #allocation1 [shape = 'u32[144,128]{1,0:T(1,128)}', space=vmem, size = 0x12000, scoped, tag = 'internal scratch']
  %s0 = inlined_call_operand.hbm [shape: bf16[16,32], index: 0, kind: input, shape index: {}]
  %s1 = inlined_call_operand.hbm [shape: bf16[176,128], index: 1, kind: input, shape index: {}]
  %s2 = inlined_call_operand.hbm [shape: f32[2,32], index: 2, kind: output, shape index: {}]
  %s3 = sld [smem:[#allocation0]]
  $region26: #{tpu_custom_call.1} parent=0
    _
  %s5 = ssub.s32 1, %s3
  %s6 = scalar_select 0, %s5, %s3
  $region1: #{tpu_custom_call.1} parent=0
    #allocation2 [shape = 'u8[4096]{0}', space=vmem, size = 0x1000, scoped, tag = 'input window, operand 0, single buffered']
    #allocation3 [shape = 's32[1]{0}', space=sflag, size = 0x4, scoped, tag = 'scoped memory for tpu_custom_call.1']
    #allocation4 [shape = 's32[1]{0}', space=sflag, size = 0x4, scoped, tag = 'scoped memory for tpu_custom_call.1']
    #allocation5 [shape = 'u8[45056]{0}', space=vmem, size = 0xb000, scoped, tag = 'input window, operand 1, single buffered']
    #allocation6 [shape = 's32[1]{0}', space=sflag, size = 0x4, scoped, tag = 'scoped memory for tpu_custom_call.1']
    #allocation7 [shape = 'u8[1024]{0}', space=vmem, size = 0x400, scoped, tag = 'output window, operand 0, single buffered']
    %7 = vsyncpa [#allocation3], 0
    %8 = vsyncpa [#allocation6], 0
    %9 = vsyncpa [#allocation4], 0
    // Predicated region
    $region2: #{tpu_custom_call.1} parent=1 // pred_check
      _
    $region3: #{tpu_custom_call.1} parent=1 // pred_check_branch
      %11 = sbr.rel (0) target = $region5
    $region4: #{tpu_custom_call.1} parent=1 // pred_region
      %s13 = ssub.s32 128, 128
      %14 = vsyncadd [#allocation3], %s13
      %s15 = sshll.u32 [#allocation2], 4
      %s16 = int_to_ptr.vmem [resolvable:$true] %s15
      %21 = dma.hbm_to_vmem [thread:$0]  %s0, 128, %s16, [#allocation3], 64, 64, 4
    $region5: #{tpu_custom_call.1} parent=1 // pred_fallthru
      _
    // Predicated region
    $region6: #{tpu_custom_call.1} parent=1 // pred_check
      _
    $region7: #{tpu_custom_call.1} parent=1 // pred_check_branch
      %23 = sbr.rel (0) target = $region9
    $region8: #{tpu_custom_call.1} parent=1 // pred_region
      %s25 = ssub.s32 1408, 1408
      %26 = vsyncadd [#allocation6], %s25
      %s27 = sshll.u32 [#allocation5], 4
      %s28 = int_to_ptr.vmem [resolvable:$true] %s27
      %33 = dma.hbm_to_vmem [thread:$0]  %s1, 1408, %s28, [#allocation6], 64, 64, 4
    $region9: #{tpu_custom_call.1} parent=1 // pred_fallthru
      _
    // Predicated region
    $region10: #{tpu_custom_call.1} parent=1 // pred_check
      _
    $region11: #{tpu_custom_call.1} parent=1 // pred_check_branch
      %35 = sbr.rel (0) target = $region13
    $region12: #{tpu_custom_call.1} parent=1 // pred_region
      %36 = dma.done [#allocation3], 128
    $region13: #{tpu_custom_call.1} parent=1 // pred_fallthru
      _
    // Predicated region
    $region14: #{tpu_custom_call.1} parent=1 // pred_check
      _
    $region15: #{tpu_custom_call.1} parent=1 // pred_check_branch
      %38 = sbr.rel (0) target = $region17
    $region16: #{tpu_custom_call.1} parent=1 // pred_region
      %39 = dma.done [#allocation6], 1408
    $region17: #{tpu_custom_call.1} parent=1 // pred_fallthru
      _
    %v41 = vld [vmem:[#allocation5] sm:$0xf]
    %v42 = vld [vmem:[#allocation5 + $0x4] sm:$0xf]
    %v43 = vld [vmem:[#allocation5 + $0x8] sm:$0xf]
    %v44 = vld [vmem:[#allocation5 + $0xc] sm:$0xf]
    %v45 = vld [vmem:[#allocation5 + $0x10] sm:$0xf]
    %v46 = vld [vmem:[#allocation5 + $0x14] sm:$0xf]
    %v47 = vld [vmem:[#allocation5 + $0x18] sm:$0xf]
    %v48 = vld [vmem:[#allocation5 + $0x1c] sm:$0xf]
    %v49 = vld [vmem:[#allocation5 + $0x20] sm:$0xf]
    %v50 = vld [vmem:[#allocation5 + $0x24] sm:$0xf]
    %v51 = vld [vmem:[#allocation5 + $0x28] sm:$0xf]
    %v52 = vld [vmem:[#allocation5 + $0x2c] sm:$0xf]
    %v53 = vld [vmem:[#allocation5 + $0x30] sm:$0xf]
    %v54 = vld [vmem:[#allocation5 + $0x34] sm:$0xf]
    %v55 = vld [vmem:[#allocation5 + $0x38] sm:$0xf]
    %v56 = vld [vmem:[#allocation5 + $0x3c] sm:$0xf]
    %v57 = vld [vmem:[#allocation5 + $0x40] sm:$0xf]
    %v58 = vld [vmem:[#allocation5 + $0x44] sm:$0xf]
    %v59 = vld [vmem:[#allocation5 + $0x48] sm:$0xf]
    %v60 = vld [vmem:[#allocation5 + $0x4c] sm:$0xf]
    %v61 = vld [vmem:[#allocation5 + $0x50] sm:$0xf]
    %v62 = vunpack.c.l.bf16 %v61
    %v63 = vld [vmem:[#allocation2] sm:$0xf]
    %v64 = vld [vmem:[#allocation2 + $0x4] sm:$0xf]
    %v67 = vunpack.c.l.b16 %v63
    %v68 = vunpack.c.l.b16 %v64
    %v69 = vpack.c.b16 %v68, %v67
    %v74 = vunpack.c.l.b16 %v41
    %v75 = vunpack.c.l.b16 %v42
    %v76 = vunpack.c.l.b16 %v43
    %v77 = vunpack.c.l.b16 %v44
    %v78 = vpack.c.b16 %v75, %v74
    %v79 = vpack.c.b16 %v77, %v76
    %vm82 = vcmask 261120
    %v84 = vsel %vm82, %v69, 0
    %86 = vmatprep.subr.bf16.mxu0 0
    %87 = vmatpush1.bf16.msra.mxu0 %v78
    %88 = vmatprep.subr.bf16.mxu0 0
    %89 = vmatpush1.bf16.msra.mxu0 %v79
    %90 = vmatprep.subr.bf16.mxu0 0
    %91 = vmatpush1.bf16.msra.mxu0 0
    %92 = vmatprep.subr.bf16.mxu0 0
    %93 = vmatpush1.bf16.msra.mxu0 0
    %94 = vmatprep.subr.bf16.mxu0 0
    %95 = vmatpush1.bf16.msra.mxu0 0
    %96 = vmatprep.subr.bf16.mxu0 0
    %97 = vmatpush1.bf16.msra.mxu0 0
    %98 = vmatprep.subr.bf16.mxu0 0
    %99 = vmatpush1.bf16.msra.mxu0 0
    %100 = vmatprep.subr.bf16.mxu0 0
    %101 = vmatpush1.bf16.msra.mxu0 0
    %102 = vmatprep.subr.bf16.mxu0 0
    %103 = vmatpush1.bf16.msra.mxu0 0
    %104 = vmatprep.subr.bf16.mxu0 0
    %105 = vmatpush1.bf16.msra.mxu0 0
    %106 = vmatprep.subr.bf16.mxu0 0
    %107 = vmatpush1.bf16.msra.mxu0 0
    %108 = vmatprep.subr.bf16.mxu0 0
    %109 = vmatpush1.bf16.msra.mxu0 0
    %110 = vmatprep.subr.bf16.mxu0 0
    %111 = vmatpush1.bf16.msra.mxu0 0
    %112 = vmatprep.subr.bf16.mxu0 0
    %113 = vmatpush1.bf16.msra.mxu0 0
    %114 = vmatprep.subr.bf16.mxu0 0
    %115 = vmatpush1.bf16.msra.mxu0 0
    %116 = vmatprep.subr.bf16.mxu0 0
    %117 = vmatpush1.bf16.msra.mxu0 0
    %118 = vmatprep.mubr.bf16.mxu0 0
    %119 = vmatmul.mubr.bf16.gmra.mrb[0].mxu0 %v84
    %v120 = vpop.f32.mrb[0].mxu0
    %v121 = vadd.f32 0.0, %v120
    %v122 = vpop.f32.mrb[0].mxu0
    %v123 = vpop.f32.mrb[0].mxu0
    %v124 = vadd.f32 0.0, %v123
    %v125 = vpop.f32.mrb[0].mxu0
    %126 = vdwg.mxu0
    %v131 = vunpack.c.l.b16 %v45
    %v132 = vunpack.c.l.b16 %v46
    %v133 = vunpack.c.l.b16 %v47
    %v134 = vunpack.c.l.b16 %v48
    %v135 = vpack.c.b16 %v132, %v131
    %v136 = vpack.c.b16 %v134, %v133
    %v140 = vsel %vm82, 0, 0
    %142 = vmatprep.subr.bf16.mxu0 0
    %143 = vmatpush1.bf16.msra.mxu0 %v135
    %144 = vmatprep.subr.bf16.mxu0 0
    %145 = vmatpush1.bf16.msra.mxu0 %v136
    %146 = vmatprep.subr.bf16.mxu0 0
    %147 = vmatpush1.bf16.msra.mxu0 0
    %148 = vmatprep.subr.bf16.mxu0 0
    %149 = vmatpush1.bf16.msra.mxu0 0
    %150 = vmatprep.subr.bf16.mxu0 0
    %151 = vmatpush1.bf16.msra.mxu0 0
    %152 = vmatprep.subr.bf16.mxu0 0
    %153 = vmatpush1.bf16.msra.mxu0 0
    %154 = vmatprep.subr.bf16.mxu0 0
    %155 = vmatpush1.bf16.msra.mxu0 0
    %156 = vmatprep.subr.bf16.mxu0 0
    %157 = vmatpush1.bf16.msra.mxu0 0
    %158 = vmatprep.subr.bf16.mxu0 0
    %159 = vmatpush1.bf16.msra.mxu0 0
    %160 = vmatprep.subr.bf16.mxu0 0
    %161 = vmatpush1.bf16.msra.mxu0 0
    %162 = vmatprep.subr.bf16.mxu0 0
    %163 = vmatpush1.bf16.msra.mxu0 0
    %164 = vmatprep.subr.bf16.mxu0 0
    %165 = vmatpush1.bf16.msra.mxu0 0
    %166 = vmatprep.subr.bf16.mxu0 0
    %167 = vmatpush1.bf16.msra.mxu0 0
    %168 = vmatprep.subr.bf16.mxu0 0
    %169 = vmatpush1.bf16.msra.mxu0 0
    %170 = vmatprep.subr.bf16.mxu0 0
    %171 = vmatpush1.bf16.msra.mxu0 0
    %172 = vmatprep.subr.bf16.mxu0 0
    %173 = vmatpush1.bf16.msra.mxu0 0
    %174 = vmatprep.mubr.bf16.mxu0 0
    %175 = vmatmul.mubr.bf16.gmra.mrb[0].mxu0 %v140
    %v176 = vpop.f32.mrb[0].mxu0
    %v177 = vadd.f32 0.0, %v176
    %v178 = vpop.f32.mrb[0].mxu0
    %v179 = vpop.f32.mrb[0].mxu0
    %v180 = vpop.f32.mrb[0].mxu0
    %181 = vdwg.mxu0
    %v182 = vadd.f32 %v121, %v177
    %v183 = vxor.u32 %v182, 2147483648
    %v184 = vmul.f32 %v183, 1.442695
    %v185 = vpow.pop %v184
    %v186 = vadd.f32 %v185, 1.0
    %v187 = vrcp.pop %v186
    %v188 = vmul.f32 1.0, %v187
    %v189 = vtanh.pop %v182
    %v190 = vmul.f32 %v188, 0.0
    %192 = vrot.lane.b32.xlu0 %v189, 32
    %v193 = vpop.permute.xlu0 %192
    %v195 = vmul.f32 %v188, %v193
    %197 = vrot.lane.b32.xlu0 %v195, 32
    %v198 = vpop.permute.xlu0 %197
    %v200 = vadd.f32 %v190, %v198
    %v201 = vtanh.pop %v200
    %203 = vrot.lane.b32.xlu0 %v201, 32
    %v204 = vpop.permute.xlu0 %203
    %v206 = vmul.f32 %v188, %v204
    %208 = vrot.lane.b32.xlu0 %v206, 64
    %v209 = vpop.permute.xlu0 %208
    %v211 = vsel %vm82, %v209, 0.0
    %v212 = vpack.c.bf16 %v211, %v211
    %v213 = vlaneseq
    %v214 = vshrl.u32 %v213, 7
    %v215 = vsub.s32 0, %v214
    %v216 = vrot.slane %v62, %v215
    %v225 = vunpack.c.l.b16 %v49
    %v226 = vunpack.c.l.b16 %v50
    %v227 = vunpack.c.l.b16 %v51
    %v228 = vunpack.c.l.b16 %v52
    %v229 = vunpack.c.l.b16 %v53
    %v230 = vunpack.c.l.b16 %v54
    %v231 = vunpack.c.l.b16 %v55
    %v232 = vunpack.c.l.b16 %v56
    %v233 = vpack.c.b16 %v226, %v225
    %v234 = vpack.c.b16 %v228, %v227
    %v235 = vpack.c.b16 %v230, %v229
    %v236 = vpack.c.b16 %v232, %v231
    %vm241 = vcmask 523264
    %v243 = vsel %vm241, %v212, 0
    %245 = vmatprep.subr.bf16.mxu0 0
    %246 = vmatpush1.bf16.msra.mxu0 %v233
    %247 = vmatprep.subr.bf16.mxu0 0
    %248 = vmatpush1.bf16.msra.mxu0 %v234
    %249 = vmatprep.subr.bf16.mxu0 0
    %250 = vmatpush1.bf16.msra.mxu0 %v235
    %251 = vmatprep.subr.bf16.mxu0 0
    %252 = vmatpush1.bf16.msra.mxu0 %v236
    %253 = vmatprep.subr.bf16.mxu0 0
    %254 = vmatpush1.bf16.msra.mxu0 0
    %255 = vmatprep.subr.bf16.mxu0 0
    %256 = vmatpush1.bf16.msra.mxu0 0
    %257 = vmatprep.subr.bf16.mxu0 0
    %258 = vmatpush1.bf16.msra.mxu0 0
    %259 = vmatprep.subr.bf16.mxu0 0
    %260 = vmatpush1.bf16.msra.mxu0 0
    %261 = vmatprep.subr.bf16.mxu0 0
    %262 = vmatpush1.bf16.msra.mxu0 0
    %263 = vmatprep.subr.bf16.mxu0 0
    %264 = vmatpush1.bf16.msra.mxu0 0
    %265 = vmatprep.subr.bf16.mxu0 0
    %266 = vmatpush1.bf16.msra.mxu0 0
    %267 = vmatprep.subr.bf16.mxu0 0
    %268 = vmatpush1.bf16.msra.mxu0 0
    %269 = vmatprep.subr.bf16.mxu0 0
    %270 = vmatpush1.bf16.msra.mxu0 0
    %271 = vmatprep.subr.bf16.mxu0 0
    %272 = vmatpush1.bf16.msra.mxu0 0
    %273 = vmatprep.subr.bf16.mxu0 0
    %274 = vmatpush1.bf16.msra.mxu0 0
    %275 = vmatprep.subr.bf16.mxu0 0
    %276 = vmatpush1.bf16.msra.mxu0 0
    %277 = vmatprep.mubr.bf16.mxu0 0
    %278 = vmatmul.mubr.bf16.gmra.mrb[0].mxu0 %v243
    %v279 = vpop.f32.mrb[0].mxu0
    %v280 = vadd.f32 %v216, %v279
    %v281 = vpop.f32.mrb[0].mxu0
    %v282 = vpop.f32.mrb[0].mxu0
    %v283 = vpop.f32.mrb[0].mxu0
    %284 = vdwg.mxu0
    %v285 = vxor.u32 %v280, 2147483648
    %v286 = vmul.f32 %v285, 1.442695
    %v287 = vpow.pop %v286
    %v288 = vadd.f32 %v287, 1.0
    %v289 = vrcp.pop %v288
    %v290 = vmul.f32 1.0, %v289
    %v291 = vtanh.pop %v280
    %v292 = vmul.f32 %v290, 0.0
    %294 = vrot.lane.b32.xlu0 %v291, 32
    %v295 = vpop.permute.xlu0 %294
    %v297 = vmul.f32 %v290, %v295
    %299 = vrot.lane.b32.xlu0 %v297, 32
    %v300 = vpop.permute.xlu0 %299
    %v302 = vadd.f32 %v292, %v300
    %v303 = vtanh.pop %v302
    %305 = vrot.lane.b32.xlu0 %v303, 32
    %v306 = vpop.permute.xlu0 %305
    %v308 = vmul.f32 %v290, %v306
    %v309 = vpack.c.bf16 %v206, %v206
    %311 = vrot.lane.b32.xlu0 %v309, 64
    %v312 = vpop.permute.xlu0 %311
    %v314 = vsel %vm82, %v312, 0
    %316 = vmatprep.subr.bf16.mxu0 0
    %317 = vmatpush1.bf16.msra.mxu0 %v135
    %318 = vmatprep.subr.bf16.mxu0 0
    %319 = vmatpush1.bf16.msra.mxu0 %v136
    %320 = vmatprep.subr.bf16.mxu0 0
    %321 = vmatpush1.bf16.msra.mxu0 0
    %322 = vmatprep.subr.bf16.mxu0 0
    %323 = vmatpush1.bf16.msra.mxu0 0
    %324 = vmatprep.subr.bf16.mxu0 0
    %325 = vmatpush1.bf16.msra.mxu0 0
    %326 = vmatprep.subr.bf16.mxu0 0
    %327 = vmatpush1.bf16.msra.mxu0 0
    %328 = vmatprep.subr.bf16.mxu0 0
    %329 = vmatpush1.bf16.msra.mxu0 0
    %330 = vmatprep.subr.bf16.mxu0 0
    %331 = vmatpush1.bf16.msra.mxu0 0
    %332 = vmatprep.subr.bf16.mxu0 0
    %333 = vmatpush1.bf16.msra.mxu0 0
    %334 = vmatprep.subr.bf16.mxu0 0
    %335 = vmatpush1.bf16.msra.mxu0 0
    %336 = vmatprep.subr.bf16.mxu0 0
    %337 = vmatpush1.bf16.msra.mxu0 0
    %338 = vmatprep.subr.bf16.mxu0 0
    %339 = vmatpush1.bf16.msra.mxu0 0
    %340 = vmatprep.subr.bf16.mxu0 0
    %341 = vmatpush1.bf16.msra.mxu0 0
    %342 = vmatprep.subr.bf16.mxu0 0
    %343 = vmatpush1.bf16.msra.mxu0 0
    %344 = vmatprep.subr.bf16.mxu0 0
    %345 = vmatpush1.bf16.msra.mxu0 0
    %346 = vmatprep.subr.bf16.mxu0 0
    %347 = vmatpush1.bf16.msra.mxu0 0
    %348 = vmatprep.mubr.bf16.mxu0 0
    %349 = vmatmul.mubr.bf16.gmra.mrb[0].mxu0 %v314
    %v350 = vpop.f32.mrb[0].mxu0
    %v351 = vadd.f32 0.0, %v350
    %v352 = vpop.f32.mrb[0].mxu0
    %v353 = vpop.f32.mrb[0].mxu0
    %v354 = vpop.f32.mrb[0].mxu0
    %355 = vdwg.mxu0
    %v357 = vrot.slane %v351, 6
    %v359 = vadd.f32 %v121, %v357
    %v360 = vxor.u32 %v359, 2147483648
    %v361 = vmul.f32 %v360, 1.442695
    %v362 = vpow.pop %v361
    %v363 = vadd.f32 %v362, 1.0
    %v364 = vrcp.pop %v363
    %v365 = vmul.f32 1.0, %v364
    %v366 = vtanh.pop %v359
    %v368 = vrot.slane %v200, 6
    %v370 = vmul.f32 %v365, %v368
    %372 = vrot.lane.b32.xlu0 %v366, 32
    %v373 = vpop.permute.xlu0 %372
    %v375 = vmul.f32 %v365, %v373
    %377 = vrot.lane.b32.xlu0 %v375, 32
    %v378 = vpop.permute.xlu0 %377
    %v380 = vadd.f32 %v370, %v378
    %v381 = vtanh.pop %v380
    %383 = vrot.lane.b32.xlu0 %v381, 32
    %v384 = vpop.permute.xlu0 %383
    %v386 = vmul.f32 %v365, %v384
    %388 = vrot.lane.b32.xlu0 %v386, 64
    %v389 = vpop.permute.xlu0 %388
    %v392 = vrot.slane %v308, 6
    %393 = vrot.lane.b32.xlu0 %v392, 96
    %v394 = vpop.permute.xlu0 %393
    %v396 = vsel %vm82, %v389, %v394
    %v397 = vpack.c.bf16 %v396, %v396
    %v399 = vrot.slane %v397, 1
    %v401 = vsel %vm241, %v399, 0
    %403 = vmatprep.subr.bf16.mxu0 0
    %404 = vmatpush1.bf16.msra.mxu0 %v233
    %405 = vmatprep.subr.bf16.mxu0 0
    %406 = vmatpush1.bf16.msra.mxu0 %v234
    %407 = vmatprep.subr.bf16.mxu0 0
    %408 = vmatpush1.bf16.msra.mxu0 %v235
    %409 = vmatprep.subr.bf16.mxu0 0
    %410 = vmatpush1.bf16.msra.mxu0 %v236
    %411 = vmatprep.subr.bf16.mxu0 0
    %412 = vmatpush1.bf16.msra.mxu0 0
    %413 = vmatprep.subr.bf16.mxu0 0
    %414 = vmatpush1.bf16.msra.mxu0 0
    %415 = vmatprep.subr.bf16.mxu0 0
    %416 = vmatpush1.bf16.msra.mxu0 0
    %417 = vmatprep.subr.bf16.mxu0 0
    %418 = vmatpush1.bf16.msra.mxu0 0
    %419 = vmatprep.subr.bf16.mxu0 0
    %420 = vmatpush1.bf16.msra.mxu0 0
    %421 = vmatprep.subr.bf16.mxu0 0
    %422 = vmatpush1.bf16.msra.mxu0 0
    %423 = vmatprep.subr.bf16.mxu0 0
    %424 = vmatpush1.bf16.msra.mxu0 0
    %425 = vmatprep.subr.bf16.mxu0 0
    %426 = vmatpush1.bf16.msra.mxu0 0
    %427 = vmatprep.subr.bf16.mxu0 0
    %428 = vmatpush1.bf16.msra.mxu0 0
    %429 = vmatprep.subr.bf16.mxu0 0
    %430 = vmatpush1.bf16.msra.mxu0 0
    %431 = vmatprep.subr.bf16.mxu0 0
    %432 = vmatpush1.bf16.msra.mxu0 0
    %433 = vmatprep.subr.bf16.mxu0 0
    %434 = vmatpush1.bf16.msra.mxu0 0
    %435 = vmatprep.mubr.bf16.mxu0 0
    %436 = vmatmul.mubr.bf16.gmra.mrb[0].mxu0 %v401
    %v437 = vpop.f32.mrb[0].mxu0
    %v438 = vadd.f32 %v216, %v437
    %v439 = vpop.f32.mrb[0].mxu0
    %v440 = vpop.f32.mrb[0].mxu0
    %v441 = vpop.f32.mrb[0].mxu0
    %442 = vdwg.mxu0
    %v443 = vxor.u32 %v438, 2147483648
    %v444 = vmul.f32 %v443, 1.442695
    %v445 = vpow.pop %v444
    %v446 = vadd.f32 %v445, 1.0
    %v447 = vrcp.pop %v446
    %v448 = vmul.f32 1.0, %v447
    %v449 = vtanh.pop %v438
    %v450 = vmul.f32 %v448, %v302
    %452 = vrot.lane.b32.xlu0 %v449, 32
    %v453 = vpop.permute.xlu0 %452
    %v455 = vmul.f32 %v448, %v453
    %457 = vrot.lane.b32.xlu0 %v455, 32
    %v458 = vpop.permute.xlu0 %457
    %v460 = vadd.f32 %v450, %v458
    %v461 = vtanh.pop %v460
    %463 = vrot.lane.b32.xlu0 %v461, 32
    %v464 = vpop.permute.xlu0 %463
    %v466 = vmul.f32 %v448, %v464
    %v467 = vpack.c.bf16 %v386, %v386
    %v469 = vrot.slane %v467, 1
    %470 = vrot.lane.b32.xlu0 %v469, 64
    %v471 = vpop.permute.xlu0 %470
    %v473 = vsel %vm82, %v471, 0
    %475 = vmatprep.subr.bf16.mxu0 0
    %476 = vmatpush1.bf16.msra.mxu0 %v135
    %477 = vmatprep.subr.bf16.mxu0 0
    %478 = vmatpush1.bf16.msra.mxu0 %v136
    %479 = vmatprep.subr.bf16.mxu0 0
    %480 = vmatpush1.bf16.msra.mxu0 0
    %481 = vmatprep.subr.bf16.mxu0 0
    %482 = vmatpush1.bf16.msra.mxu0 0
    %483 = vmatprep.subr.bf16.mxu0 0
    %484 = vmatpush1.bf16.msra.mxu0 0
    %485 = vmatprep.subr.bf16.mxu0 0
    %486 = vmatpush1.bf16.msra.mxu0 0
    %487 = vmatprep.subr.bf16.mxu0 0
    %488 = vmatpush1.bf16.msra.mxu0 0
    %489 = vmatprep.subr.bf16.mxu0 0
    %490 = vmatpush1.bf16.msra.mxu0 0
    %491 = vmatprep.subr.bf16.mxu0 0
    %492 = vmatpush1.bf16.msra.mxu0 0
    %493 = vmatprep.subr.bf16.mxu0 0
    %494 = vmatpush1.bf16.msra.mxu0 0
    %495 = vmatprep.subr.bf16.mxu0 0
    %496 = vmatpush1.bf16.msra.mxu0 0
    %497 = vmatprep.subr.bf16.mxu0 0
    %498 = vmatpush1.bf16.msra.mxu0 0
    %499 = vmatprep.subr.bf16.mxu0 0
    %500 = vmatpush1.bf16.msra.mxu0 0
    %501 = vmatprep.subr.bf16.mxu0 0
    %502 = vmatpush1.bf16.msra.mxu0 0
    %503 = vmatprep.subr.bf16.mxu0 0
    %504 = vmatpush1.bf16.msra.mxu0 0
    %505 = vmatprep.subr.bf16.mxu0 0
    %506 = vmatpush1.bf16.msra.mxu0 0
    %507 = vmatprep.mubr.bf16.mxu0 0
    %508 = vmatmul.mubr.bf16.gmra.mrb[0].mxu0 %v473
    %v509 = vpop.f32.mrb[0].mxu0
    %v510 = vadd.f32 0.0, %v509
    %v511 = vpop.f32.mrb[0].mxu0
    %v512 = vpop.f32.mrb[0].mxu0
    %v513 = vpop.f32.mrb[0].mxu0
    %514 = vdwg.mxu0
    %v516 = vrot.slane %v510, 4
    %v518 = vadd.f32 %v121, %v516
    %v519 = vxor.u32 %v518, 2147483648
    %v520 = vmul.f32 %v519, 1.442695
    %v521 = vpow.pop %v520
    %v522 = vadd.f32 %v521, 1.0
    %v523 = vrcp.pop %v522
    %v524 = vmul.f32 1.0, %v523
    %v525 = vtanh.pop %v518
    %v527 = vrot.slane %v380, 6
    %v529 = vmul.f32 %v524, %v527
    %531 = vrot.lane.b32.xlu0 %v525, 32
    %v532 = vpop.permute.xlu0 %531
    %v534 = vmul.f32 %v524, %v532
    %536 = vrot.lane.b32.xlu0 %v534, 32
    %v537 = vpop.permute.xlu0 %536
    %v539 = vadd.f32 %v529, %v537
    %v540 = vtanh.pop %v539
    %542 = vrot.lane.b32.xlu0 %v540, 32
    %v543 = vpop.permute.xlu0 %542
    %v545 = vmul.f32 %v524, %v543
    %547 = vrot.lane.b32.xlu0 %v545, 64
    %v548 = vpop.permute.xlu0 %547
    %v551 = vrot.slane %v466, 4
    %552 = vrot.lane.b32.xlu0 %v551, 96
    %v553 = vpop.permute.xlu0 %552
    %v555 = vsel %vm82, %v548, %v553
    %v556 = vpack.c.bf16 %v555, %v555
    %v558 = vrot.slane %v556, 2
    %v560 = vsel %vm241, %v558, 0
    %562 = vmatprep.subr.bf16.mxu0 0
    %563 = vmatpush1.bf16.msra.mxu0 %v233
    %564 = vmatprep.subr.bf16.mxu0 0
    %565 = vmatpush1.bf16.msra.mxu0 %v234
    %566 = vmatprep.subr.bf16.mxu0 0
    %567 = vmatpush1.bf16.msra.mxu0 %v235
    %568 = vmatprep.subr.bf16.mxu0 0
    %569 = vmatpush1.bf16.msra.mxu0 %v236
    %570 = vmatprep.subr.bf16.mxu0 0
    %571 = vmatpush1.bf16.msra.mxu0 0
    %572 = vmatprep.subr.bf16.mxu0 0
    %573 = vmatpush1.bf16.msra.mxu0 0
    %574 = vmatprep.subr.bf16.mxu0 0
    %575 = vmatpush1.bf16.msra.mxu0 0
    %576 = vmatprep.subr.bf16.mxu0 0
    %577 = vmatpush1.bf16.msra.mxu0 0
    %578 = vmatprep.subr.bf16.mxu0 0
    %579 = vmatpush1.bf16.msra.mxu0 0
    %580 = vmatprep.subr.bf16.mxu0 0
    %581 = vmatpush1.bf16.msra.mxu0 0
    %582 = vmatprep.subr.bf16.mxu0 0
    %583 = vmatpush1.bf16.msra.mxu0 0
    %584 = vmatprep.subr.bf16.mxu0 0
    %585 = vmatpush1.bf16.msra.mxu0 0
    %586 = vmatprep.subr.bf16.mxu0 0
    %587 = vmatpush1.bf16.msra.mxu0 0
    %588 = vmatprep.subr.bf16.mxu0 0
    %589 = vmatpush1.bf16.msra.mxu0 0
    %590 = vmatprep.subr.bf16.mxu0 0
    %591 = vmatpush1.bf16.msra.mxu0 0
    %592 = vmatprep.subr.bf16.mxu0 0
    %593 = vmatpush1.bf16.msra.mxu0 0
    %594 = vmatprep.mubr.bf16.mxu0 0
    %595 = vmatmul.mubr.bf16.gmra.mrb[0].mxu0 %v560
    %v596 = vpop.f32.mrb[0].mxu0
    %v597 = vadd.f32 %v216, %v596
    %v598 = vpop.f32.mrb[0].mxu0
    %v599 = vpop.f32.mrb[0].mxu0
    %v600 = vpop.f32.mrb[0].mxu0
    %601 = vdwg.mxu0
    %v602 = vxor.u32 %v597, 2147483648
    %v603 = vmul.f32 %v602, 1.442695
    %v604 = vpow.pop %v603
    %v605 = vadd.f32 %v604, 1.0
    %v606 = vrcp.pop %v605
    %v607 = vmul.f32 1.0, %v606
    %v608 = vtanh.pop %v597
    %v609 = vmul.f32 %v607, %v460
    %611 = vrot.lane.b32.xlu0 %v608, 32
    %v612 = vpop.permute.xlu0 %611
    %v614 = vmul.f32 %v607, %v612
    %616 = vrot.lane.b32.xlu0 %v614, 32
    %v617 = vpop.permute.xlu0 %616
    %v619 = vadd.f32 %v609, %v617
    %v620 = vtanh.pop %v619
    %622 = vrot.lane.b32.xlu0 %v620, 32
    %v623 = vpop.permute.xlu0 %622
    %v625 = vmul.f32 %v607, %v623
    %v626 = vpack.c.bf16 %v545, %v545
    %v628 = vrot.slane %v626, 2
    %629 = vrot.lane.b32.xlu0 %v628, 64
    %v630 = vpop.permute.xlu0 %629
    %v632 = vsel %vm82, %v630, 0
    %634 = vmatprep.subr.bf16.mxu0 0
    %635 = vmatpush1.bf16.msra.mxu0 %v135
    %636 = vmatprep.subr.bf16.mxu0 0
    %637 = vmatpush1.bf16.msra.mxu0 %v136
    %638 = vmatprep.subr.bf16.mxu0 0
    %639 = vmatpush1.bf16.msra.mxu0 0
    %640 = vmatprep.subr.bf16.mxu0 0
    %641 = vmatpush1.bf16.msra.mxu0 0
    %642 = vmatprep.subr.bf16.mxu0 0
    %643 = vmatpush1.bf16.msra.mxu0 0
    %644 = vmatprep.subr.bf16.mxu0 0
    %645 = vmatpush1.bf16.msra.mxu0 0
    %646 = vmatprep.subr.bf16.mxu0 0
    %647 = vmatpush1.bf16.msra.mxu0 0
    %648 = vmatprep.subr.bf16.mxu0 0
    %649 = vmatpush1.bf16.msra.mxu0 0
    %650 = vmatprep.subr.bf16.mxu0 0
    %651 = vmatpush1.bf16.msra.mxu0 0
    %652 = vmatprep.subr.bf16.mxu0 0
    %653 = vmatpush1.bf16.msra.mxu0 0
    %654 = vmatprep.subr.bf16.mxu0 0
    %655 = vmatpush1.bf16.msra.mxu0 0
    %656 = vmatprep.subr.bf16.mxu0 0
    %657 = vmatpush1.bf16.msra.mxu0 0
    %658 = vmatprep.subr.bf16.mxu0 0
    %659 = vmatpush1.bf16.msra.mxu0 0
    %660 = vmatprep.subr.bf16.mxu0 0
    %661 = vmatpush1.bf16.msra.mxu0 0
    %662 = vmatprep.subr.bf16.mxu0 0
    %663 = vmatpush1.bf16.msra.mxu0 0
    %664 = vmatprep.subr.bf16.mxu0 0
    %665 = vmatpush1.bf16.msra.mxu0 0
    %666 = vmatprep.mubr.bf16.mxu0 0
    %667 = vmatmul.mubr.bf16.gmra.mrb[0].mxu0 %v632
    %v668 = vpop.f32.mrb[0].mxu0
    %v669 = vadd.f32 0.0, %v668
    %v670 = vpop.f32.mrb[0].mxu0
    %v671 = vpop.f32.mrb[0].mxu0
    %v672 = vpop.f32.mrb[0].mxu0
    %673 = vdwg.mxu0
    %v675 = vrot.slane %v669, 2
    %v677 = vadd.f32 %v121, %v675
    %v678 = vxor.u32 %v677, 2147483648
    %v679 = vmul.f32 %v678, 1.442695
    %v680 = vpow.pop %v679
    %v681 = vadd.f32 %v680, 1.0
    %v682 = vrcp.pop %v681
    %v683 = vmul.f32 1.0, %v682
    %v684 = vtanh.pop %v677
    %v686 = vrot.slane %v539, 6
    %v688 = vmul.f32 %v683, %v686
    %690 = vrot.lane.b32.xlu0 %v684, 32
    %v691 = vpop.permute.xlu0 %690
    %v693 = vmul.f32 %v683, %v691
    %695 = vrot.lane.b32.xlu0 %v693, 32
    %v696 = vpop.permute.xlu0 %695
    %v698 = vadd.f32 %v688, %v696
    %v699 = vtanh.pop %v698
    %701 = vrot.lane.b32.xlu0 %v699, 32
    %v702 = vpop.permute.xlu0 %701
    %v704 = vmul.f32 %v683, %v702
    %706 = vrot.lane.b32.xlu0 %v704, 64
    %v707 = vpop.permute.xlu0 %706
    %v710 = vrot.slane %v625, 2
    %711 = vrot.lane.b32.xlu0 %v710, 96
    %v712 = vpop.permute.xlu0 %711
    %v714 = vsel %vm82, %v707, %v712
    %v715 = vpack.c.bf16 %v714, %v714
    %v717 = vrot.slane %v715, 3
    %v719 = vsel %vm241, %v717, 0
    %721 = vmatprep.subr.bf16.mxu0 0
    %722 = vmatpush1.bf16.msra.mxu0 %v233
    %723 = vmatprep.subr.bf16.mxu0 0
    %724 = vmatpush1.bf16.msra.mxu0 %v234
    %725 = vmatprep.subr.bf16.mxu0 0
    %726 = vmatpush1.bf16.msra.mxu0 %v235
    %727 = vmatprep.subr.bf16.mxu0 0
    %728 = vmatpush1.bf16.msra.mxu0 %v236
    %729 = vmatprep.subr.bf16.mxu0 0
    %730 = vmatpush1.bf16.msra.mxu0 0
    %731 = vmatprep.subr.bf16.mxu0 0
    %732 = vmatpush1.bf16.msra.mxu0 0
    %733 = vmatprep.subr.bf16.mxu0 0
    %734 = vmatpush1.bf16.msra.mxu0 0
    %735 = vmatprep.subr.bf16.mxu0 0
    %736 = vmatpush1.bf16.msra.mxu0 0
    %737 = vmatprep.subr.bf16.mxu0 0
    %738 = vmatpush1.bf16.msra.mxu0 0
    %739 = vmatprep.subr.bf16.mxu0 0
    %740 = vmatpush1.bf16.msra.mxu0 0
    %741 = vmatprep.subr.bf16.mxu0 0
    %742 = vmatpush1.bf16.msra.mxu0 0
    %743 = vmatprep.subr.bf16.mxu0 0
    %744 = vmatpush1.bf16.msra.mxu0 0
    %745 = vmatprep.subr.bf16.mxu0 0
    %746 = vmatpush1.bf16.msra.mxu0 0
    %747 = vmatprep.subr.bf16.mxu0 0
    %748 = vmatpush1.bf16.msra.mxu0 0
    %749 = vmatprep.subr.bf16.mxu0 0
    %750 = vmatpush1.bf16.msra.mxu0 0
    %751 = vmatprep.subr.bf16.mxu0 0
    %752 = vmatpush1.bf16.msra.mxu0 0
    %753 = vmatprep.mubr.bf16.mxu0 0
    %754 = vmatmul.mubr.bf16.gmra.mrb[0].mxu0 %v719
    %v755 = vpop.f32.mrb[0].mxu0
    %v756 = vadd.f32 %v216, %v755
    %v757 = vpop.f32.mrb[0].mxu0
    %v758 = vpop.f32.mrb[0].mxu0
    %v759 = vpop.f32.mrb[0].mxu0
    %760 = vdwg.mxu0
    %v761 = vxor.u32 %v756, 2147483648
    %v762 = vmul.f32 %v761, 1.442695
    %v763 = vpow.pop %v762
    %v764 = vadd.f32 %v763, 1.0
    %v765 = vrcp.pop %v764
    %v766 = vmul.f32 1.0, %v765
    %v767 = vtanh.pop %v756
    %v768 = vmul.f32 %v766, %v619
    %770 = vrot.lane.b32.xlu0 %v767, 32
    %v771 = vpop.permute.xlu0 %770
    %v773 = vmul.f32 %v766, %v771
    %775 = vrot.lane.b32.xlu0 %v773, 32
    %v776 = vpop.permute.xlu0 %775
    %v778 = vadd.f32 %v768, %v776
    %v779 = vtanh.pop %v778
    %781 = vrot.lane.b32.xlu0 %v779, 32
    %v782 = vpop.permute.xlu0 %781
    %v784 = vmul.f32 %v766, %v782
    %v785 = vpack.c.bf16 %v704, %v704
    %v787 = vrot.slane %v785, 3
    %788 = vrot.lane.b32.xlu0 %v787, 64
    %v789 = vpop.permute.xlu0 %788
    %v791 = vsel %vm82, %v789, 0
    %793 = vmatprep.subr.bf16.mxu0 0
    %794 = vmatpush1.bf16.msra.mxu0 %v135
    %795 = vmatprep.subr.bf16.mxu0 0
    %796 = vmatpush1.bf16.msra.mxu0 %v136
    %797 = vmatprep.subr.bf16.mxu0 0
    %798 = vmatpush1.bf16.msra.mxu0 0
    %799 = vmatprep.subr.bf16.mxu0 0
    %800 = vmatpush1.bf16.msra.mxu0 0
    %801 = vmatprep.subr.bf16.mxu0 0
    %802 = vmatpush1.bf16.msra.mxu0 0
    %803 = vmatprep.subr.bf16.mxu0 0
    %804 = vmatpush1.bf16.msra.mxu0 0
    %805 = vmatprep.subr.bf16.mxu0 0
    %806 = vmatpush1.bf16.msra.mxu0 0
    %807 = vmatprep.subr.bf16.mxu0 0
    %808 = vmatpush1.bf16.msra.mxu0 0
    %809 = vmatprep.subr.bf16.mxu0 0
    %810 = vmatpush1.bf16.msra.mxu0 0
    %811 = vmatprep.subr.bf16.mxu0 0
    %812 = vmatpush1.bf16.msra.mxu0 0
    %813 = vmatprep.subr.bf16.mxu0 0
    %814 = vmatpush1.bf16.msra.mxu0 0
    %815 = vmatprep.subr.bf16.mxu0 0
    %816 = vmatpush1.bf16.msra.mxu0 0
    %817 = vmatprep.subr.bf16.mxu0 0
    %818 = vmatpush1.bf16.msra.mxu0 0
    %819 = vmatprep.subr.bf16.mxu0 0
    %820 = vmatpush1.bf16.msra.mxu0 0
    %821 = vmatprep.subr.bf16.mxu0 0
    %822 = vmatpush1.bf16.msra.mxu0 0
    %823 = vmatprep.subr.bf16.mxu0 0
    %824 = vmatpush1.bf16.msra.mxu0 0
    %825 = vmatprep.mubr.bf16.mxu0 0
    %826 = vmatmul.mubr.bf16.gmra.mrb[0].mxu0 %v791
    %v827 = vpop.f32.mrb[0].mxu0
    %v828 = vadd.f32 0.0, %v827
    %v829 = vpop.f32.mrb[0].mxu0
    %v830 = vpop.f32.mrb[0].mxu0
    %v831 = vpop.f32.mrb[0].mxu0
    %832 = vdwg.mxu0
    %v833 = vadd.f32 %v124, %v828
    %v834 = vxor.u32 %v833, 2147483648
    %v835 = vmul.f32 %v834, 1.442695
    %v836 = vpow.pop %v835
    %v837 = vadd.f32 %v836, 1.0
    %v838 = vrcp.pop %v837
    %v839 = vmul.f32 1.0, %v838
    %v840 = vtanh.pop %v833
    %v842 = vrot.slane %v698, 6
    %v844 = vmul.f32 %v839, %v842
    %846 = vrot.lane.b32.xlu0 %v840, 32
    %v847 = vpop.permute.xlu0 %846
    %v849 = vmul.f32 %v839, %v847
    %851 = vrot.lane.b32.xlu0 %v849, 32
    %v852 = vpop.permute.xlu0 %851
    %v854 = vadd.f32 %v844, %v852
    %v855 = vtanh.pop %v854
    %857 = vrot.lane.b32.xlu0 %v855, 32
    %v858 = vpop.permute.xlu0 %857
    %v860 = vmul.f32 %v839, %v858
    %862 = vrot.lane.b32.xlu0 %v860, 64
    %v863 = vpop.permute.xlu0 %862
    %866 = vrot.lane.b32.xlu0 %v784, 96
    %v867 = vpop.permute.xlu0 %866
    %v869 = vsel %vm82, %v863, %v867
    %v870 = vpack.c.bf16 %v869, %v869
    %v872 = vsel %vm241, %v870, 0
    %874 = vmatprep.subr.bf16.mxu0 0
    %875 = vmatpush1.bf16.msra.mxu0 %v233
    %876 = vmatprep.subr.bf16.mxu0 0
    %877 = vmatpush1.bf16.msra.mxu0 %v234
    %878 = vmatprep.subr.bf16.mxu0 0
    %879 = vmatpush1.bf16.msra.mxu0 %v235
    %880 = vmatprep.subr.bf16.mxu0 0
    %881 = vmatpush1.bf16.msra.mxu0 %v236
    %882 = vmatprep.subr.bf16.mxu0 0
    %883 = vmatpush1.bf16.msra.mxu0 0
    %884 = vmatprep.subr.bf16.mxu0 0
    %885 = vmatpush1.bf16.msra.mxu0 0
    %886 = vmatprep.subr.bf16.mxu0 0
    %887 = vmatpush1.bf16.msra.mxu0 0
    %888 = vmatprep.subr.bf16.mxu0 0
    %889 = vmatpush1.bf16.msra.mxu0 0
    %890 = vmatprep.subr.bf16.mxu0 0
    %891 = vmatpush1.bf16.msra.mxu0 0
    %892 = vmatprep.subr.bf16.mxu0 0
    %893 = vmatpush1.bf16.msra.mxu0 0
    %894 = vmatprep.subr.bf16.mxu0 0
    %895 = vmatpush1.bf16.msra.mxu0 0
    %896 = vmatprep.subr.bf16.mxu0 0
    %897 = vmatpush1.bf16.msra.mxu0 0
    %898 = vmatprep.subr.bf16.mxu0 0
    %899 = vmatpush1.bf16.msra.mxu0 0
    %900 = vmatprep.subr.bf16.mxu0 0
    %901 = vmatpush1.bf16.msra.mxu0 0
    %902 = vmatprep.subr.bf16.mxu0 0
    %903 = vmatpush1.bf16.msra.mxu0 0
    %904 = vmatprep.subr.bf16.mxu0 0
    %905 = vmatpush1.bf16.msra.mxu0 0
    %906 = vmatprep.mubr.bf16.mxu0 0
    %907 = vmatmul.mubr.bf16.gmra.mrb[0].mxu0 %v872
    %v908 = vpop.f32.mrb[0].mxu0
    %v909 = vadd.f32 %v216, %v908
    %v910 = vpop.f32.mrb[0].mxu0
    %v911 = vpop.f32.mrb[0].mxu0
    %v912 = vpop.f32.mrb[0].mxu0
    %913 = vdwg.mxu0
    %v914 = vxor.u32 %v909, 2147483648
    %v915 = vmul.f32 %v914, 1.442695
    %v916 = vpow.pop %v915
    %v917 = vadd.f32 %v916, 1.0
    %v918 = vrcp.pop %v917
    %v919 = vmul.f32 1.0, %v918
    %v920 = vtanh.pop %v909
    %v921 = vmul.f32 %v919, %v778
    %923 = vrot.lane.b32.xlu0 %v920, 32
    %v924 = vpop.permute.xlu0 %923
    %v926 = vmul.f32 %v919, %v924
    %928 = vrot.lane.b32.xlu0 %v926, 32
    %v929 = vpop.permute.xlu0 %928
    %v931 = vadd.f32 %v921, %v929
    %v932 = vtanh.pop %v931
    %934 = vrot.lane.b32.xlu0 %v932, 32
    %v935 = vpop.permute.xlu0 %934
    %v937 = vmul.f32 %v919, %v935
    %v938 = vpack.c.bf16 %v860, %v860
    %940 = vrot.lane.b32.xlu0 %v938, 64
    %v941 = vpop.permute.xlu0 %940
    %v943 = vsel %vm82, %v941, 0
    %945 = vmatprep.subr.bf16.mxu0 0
    %946 = vmatpush1.bf16.msra.mxu0 %v135
    %947 = vmatprep.subr.bf16.mxu0 0
    %948 = vmatpush1.bf16.msra.mxu0 %v136
    %949 = vmatprep.subr.bf16.mxu0 0
    %950 = vmatpush1.bf16.msra.mxu0 0
    %951 = vmatprep.subr.bf16.mxu0 0
    %952 = vmatpush1.bf16.msra.mxu0 0
    %953 = vmatprep.subr.bf16.mxu0 0
    %954 = vmatpush1.bf16.msra.mxu0 0
    %955 = vmatprep.subr.bf16.mxu0 0
    %956 = vmatpush1.bf16.msra.mxu0 0
    %957 = vmatprep.subr.bf16.mxu0 0
    %958 = vmatpush1.bf16.msra.mxu0 0
    %959 = vmatprep.subr.bf16.mxu0 0
    %960 = vmatpush1.bf16.msra.mxu0 0
    %961 = vmatprep.subr.bf16.mxu0 0
    %962 = vmatpush1.bf16.msra.mxu0 0
    %963 = vmatprep.subr.bf16.mxu0 0
    %964 = vmatpush1.bf16.msra.mxu0 0
    %965 = vmatprep.subr.bf16.mxu0 0
    %966 = vmatpush1.bf16.msra.mxu0 0
    %967 = vmatprep.subr.bf16.mxu0 0
    %968 = vmatpush1.bf16.msra.mxu0 0
    %969 = vmatprep.subr.bf16.mxu0 0
    %970 = vmatpush1.bf16.msra.mxu0 0
    %971 = vmatprep.subr.bf16.mxu0 0
    %972 = vmatpush1.bf16.msra.mxu0 0
    %973 = vmatprep.subr.bf16.mxu0 0
    %974 = vmatpush1.bf16.msra.mxu0 0
    %975 = vmatprep.subr.bf16.mxu0 0
    %976 = vmatpush1.bf16.msra.mxu0 0
    %977 = vmatprep.mubr.bf16.mxu0 0
    %978 = vmatmul.mubr.bf16.gmra.mrb[0].mxu0 %v943
    %v979 = vpop.f32.mrb[0].mxu0
    %v980 = vadd.f32 0.0, %v979
    %v981 = vpop.f32.mrb[0].mxu0
    %v982 = vpop.f32.mrb[0].mxu0
    %v983 = vpop.f32.mrb[0].mxu0
    %984 = vdwg.mxu0
    %v986 = vrot.slane %v980, 6
    %v988 = vadd.f32 %v124, %v986
    %v989 = vxor.u32 %v988, 2147483648
    %v990 = vmul.f32 %v989, 1.442695
    %v991 = vpow.pop %v990
    %v992 = vadd.f32 %v991, 1.0
    %v993 = vrcp.pop %v992
    %v994 = vmul.f32 1.0, %v993
    %v995 = vtanh.pop %v988
    %v997 = vrot.slane %v854, 6
    %v999 = vmul.f32 %v994, %v997
    %1001 = vrot.lane.b32.xlu0 %v995, 32
    %v1002 = vpop.permute.xlu0 %1001
    %v1004 = vmul.f32 %v994, %v1002
    %1006 = vrot.lane.b32.xlu0 %v1004, 32
    %v1007 = vpop.permute.xlu0 %1006
    %v1009 = vadd.f32 %v999, %v1007
    %v1010 = vtanh.pop %v1009
    %1012 = vrot.lane.b32.xlu0 %v1010, 32
    %v1013 = vpop.permute.xlu0 %1012
    %v1015 = vmul.f32 %v994, %v1013
    %1017 = vrot.lane.b32.xlu0 %v1015, 64
    %v1018 = vpop.permute.xlu0 %1017
    %v1021 = vrot.slane %v937, 6
    %1022 = vrot.lane.b32.xlu0 %v1021, 96
    %v1023 = vpop.permute.xlu0 %1022
    %v1025 = vsel %vm82, %v1018, %v1023
    %v1026 = vpack.c.bf16 %v1025, %v1025
    %v1028 = vrot.slane %v1026, 1
    %v1030 = vsel %vm241, %v1028, 0
    %1032 = vmatprep.subr.bf16.mxu0 0
    %1033 = vmatpush1.bf16.msra.mxu0 %v233
    %1034 = vmatprep.subr.bf16.mxu0 0
    %1035 = vmatpush1.bf16.msra.mxu0 %v234
    %1036 = vmatprep.subr.bf16.mxu0 0
    %1037 = vmatpush1.bf16.msra.mxu0 %v235
    %1038 = vmatprep.subr.bf16.mxu0 0
    %1039 = vmatpush1.bf16.msra.mxu0 %v236
    %1040 = vmatprep.subr.bf16.mxu0 0
    %1041 = vmatpush1.bf16.msra.mxu0 0
    %1042 = vmatprep.subr.bf16.mxu0 0
    %1043 = vmatpush1.bf16.msra.mxu0 0
    %1044 = vmatprep.subr.bf16.mxu0 0
    %1045 = vmatpush1.bf16.msra.mxu0 0
    %1046 = vmatprep.subr.bf16.mxu0 0
    %1047 = vmatpush1.bf16.msra.mxu0 0
    %1048 = vmatprep.subr.bf16.mxu0 0
    %1049 = vmatpush1.bf16.msra.mxu0 0
    %1050 = vmatprep.subr.bf16.mxu0 0
    %1051 = vmatpush1.bf16.msra.mxu0 0
    %1052 = vmatprep.subr.bf16.mxu0 0
    %1053 = vmatpush1.bf16.msra.mxu0 0
    %1054 = vmatprep.subr.bf16.mxu0 0
    %1055 = vmatpush1.bf16.msra.mxu0 0
    %1056 = vmatprep.subr.bf16.mxu0 0
    %1057 = vmatpush1.bf16.msra.mxu0 0
    %1058 = vmatprep.subr.bf16.mxu0 0
    %1059 = vmatpush1.bf16.msra.mxu0 0
    %1060 = vmatprep.subr.bf16.mxu0 0
    %1061 = vmatpush1.bf16.msra.mxu0 0
    %1062 = vmatprep.subr.bf16.mxu0 0
    %1063 = vmatpush1.bf16.msra.mxu0 0
    %1064 = vmatprep.mubr.bf16.mxu0 0
    %1065 = vmatmul.mubr.bf16.gmra.mrb[0].mxu0 %v1030
    %v1066 = vpop.f32.mrb[0].mxu0
    %v1067 = vadd.f32 %v216, %v1066
    %v1068 = vpop.f32.mrb[0].mxu0
    %v1069 = vpop.f32.mrb[0].mxu0
    %v1070 = vpop.f32.mrb[0].mxu0
    %1071 = vdwg.mxu0
    %v1072 = vxor.u32 %v1067, 2147483648
    %v1073 = vmul.f32 %v1072, 1.442695
    %v1074 = vpow.pop %v1073
    %v1075 = vadd.f32 %v1074, 1.0
    %v1076 = vrcp.pop %v1075
    %v1077 = vmul.f32 1.0, %v1076
    %v1078 = vtanh.pop %v1067
    %v1079 = vmul.f32 %v1077, %v931
    %1081 = vrot.lane.b32.xlu0 %v1078, 32
    %v1082 = vpop.permute.xlu0 %1081
    %v1084 = vmul.f32 %v1077, %v1082
    %1086 = vrot.lane.b32.xlu0 %v1084, 32
    %v1087 = vpop.permute.xlu0 %1086
    %v1089 = vadd.f32 %v1079, %v1087
    %v1090 = vtanh.pop %v1089
    %1092 = vrot.lane.b32.xlu0 %v1090, 32
    %v1093 = vpop.permute.xlu0 %1092
    %v1095 = vmul.f32 %v1077, %v1093
    %v1096 = vpack.c.bf16 %v1015, %v1015
    %v1098 = vrot.slane %v1096, 1
    %1099 = vrot.lane.b32.xlu0 %v1098, 64
    %v1100 = vpop.permute.xlu0 %1099
    %v1102 = vsel %vm82, %v1100, 0
    %1104 = vmatprep.subr.bf16.mxu0 0
    %1105 = vmatpush1.bf16.msra.mxu0 %v135
    %1106 = vmatprep.subr.bf16.mxu0 0
    %1107 = vmatpush1.bf16.msra.mxu0 %v136
    %1108 = vmatprep.subr.bf16.mxu0 0
    %1109 = vmatpush1.bf16.msra.mxu0 0
    %1110 = vmatprep.subr.bf16.mxu0 0
    %1111 = vmatpush1.bf16.msra.mxu0 0
    %1112 = vmatprep.subr.bf16.mxu0 0
    %1113 = vmatpush1.bf16.msra.mxu0 0
    %1114 = vmatprep.subr.bf16.mxu0 0
    %1115 = vmatpush1.bf16.msra.mxu0 0
    %1116 = vmatprep.subr.bf16.mxu0 0
    %1117 = vmatpush1.bf16.msra.mxu0 0
    %1118 = vmatprep.subr.bf16.mxu0 0
    %1119 = vmatpush1.bf16.msra.mxu0 0
    %1120 = vmatprep.subr.bf16.mxu0 0
    %1121 = vmatpush1.bf16.msra.mxu0 0
    %1122 = vmatprep.subr.bf16.mxu0 0
    %1123 = vmatpush1.bf16.msra.mxu0 0
    %1124 = vmatprep.subr.bf16.mxu0 0
    %1125 = vmatpush1.bf16.msra.mxu0 0
    %1126 = vmatprep.subr.bf16.mxu0 0
    %1127 = vmatpush1.bf16.msra.mxu0 0
    %1128 = vmatprep.subr.bf16.mxu0 0
    %1129 = vmatpush1.bf16.msra.mxu0 0
    %1130 = vmatprep.subr.bf16.mxu0 0
    %1131 = vmatpush1.bf16.msra.mxu0 0
    %1132 = vmatprep.subr.bf16.mxu0 0
    %1133 = vmatpush1.bf16.msra.mxu0 0
    %1134 = vmatprep.subr.bf16.mxu0 0
    %1135 = vmatpush1.bf16.msra.mxu0 0
    %1136 = vmatprep.mubr.bf16.mxu0 0
    %1137 = vmatmul.mubr.bf16.gmra.mrb[0].mxu0 %v1102
    %v1138 = vpop.f32.mrb[0].mxu0
    %v1139 = vadd.f32 0.0, %v1138
    %v1140 = vpop.f32.mrb[0].mxu0
    %v1141 = vpop.f32.mrb[0].mxu0
    %v1142 = vpop.f32.mrb[0].mxu0
    %1143 = vdwg.mxu0
    %v1145 = vrot.slane %v1139, 4
    %v1147 = vadd.f32 %v124, %v1145
    %v1148 = vxor.u32 %v1147, 2147483648
    %v1149 = vmul.f32 %v1148, 1.442695
    %v1150 = vpow.pop %v1149
    %v1151 = vadd.f32 %v1150, 1.0
    %v1152 = vrcp.pop %v1151
    %v1153 = vmul.f32 1.0, %v1152
    %v1154 = vtanh.pop %v1147
    %v1156 = vrot.slane %v1009, 6
    %v1158 = vmul.f32 %v1153, %v1156
    %1160 = vrot.lane.b32.xlu0 %v1154, 32
    %v1161 = vpop.permute.xlu0 %1160
    %v1163 = vmul.f32 %v1153, %v1161
    %1165 = vrot.lane.b32.xlu0 %v1163, 32
    %v1166 = vpop.permute.xlu0 %1165
    %v1168 = vadd.f32 %v1158, %v1166
    %v1169 = vtanh.pop %v1168
    %1171 = vrot.lane.b32.xlu0 %v1169, 32
    %v1172 = vpop.permute.xlu0 %1171
    %v1174 = vmul.f32 %v1153, %v1172
    %1176 = vrot.lane.b32.xlu0 %v1174, 64
    %v1177 = vpop.permute.xlu0 %1176
    %v1180 = vrot.slane %v1095, 4
    %1181 = vrot.lane.b32.xlu0 %v1180, 96
    %v1182 = vpop.permute.xlu0 %1181
    %v1184 = vsel %vm82, %v1177, %v1182
    %v1185 = vpack.c.bf16 %v1184, %v1184
    %v1187 = vrot.slane %v1185, 2
    %v1189 = vsel %vm241, %v1187, 0
    %1191 = vmatprep.subr.bf16.mxu0 0
    %1192 = vmatpush1.bf16.msra.mxu0 %v233
    %1193 = vmatprep.subr.bf16.mxu0 0
    %1194 = vmatpush1.bf16.msra.mxu0 %v234
    %1195 = vmatprep.subr.bf16.mxu0 0
    %1196 = vmatpush1.bf16.msra.mxu0 %v235
    %1197 = vmatprep.subr.bf16.mxu0 0
    %1198 = vmatpush1.bf16.msra.mxu0 %v236
    %1199 = vmatprep.subr.bf16.mxu0 0
    %1200 = vmatpush1.bf16.msra.mxu0 0
    %1201 = vmatprep.subr.bf16.mxu0 0
    %1202 = vmatpush1.bf16.msra.mxu0 0
    %1203 = vmatprep.subr.bf16.mxu0 0
    %1204 = vmatpush1.bf16.msra.mxu0 0
    %1205 = vmatprep.subr.bf16.mxu0 0
    %1206 = vmatpush1.bf16.msra.mxu0 0
    %1207 = vmatprep.subr.bf16.mxu0 0
    %1208 = vmatpush1.bf16.msra.mxu0 0
    %1209 = vmatprep.subr.bf16.mxu0 0
    %1210 = vmatpush1.bf16.msra.mxu0 0
    %1211 = vmatprep.subr.bf16.mxu0 0
    %1212 = vmatpush1.bf16.msra.mxu0 0
    %1213 = vmatprep.subr.bf16.mxu0 0
    %1214 = vmatpush1.bf16.msra.mxu0 0
    %1215 = vmatprep.subr.bf16.mxu0 0
    %1216 = vmatpush1.bf16.msra.mxu0 0
    %1217 = vmatprep.subr.bf16.mxu0 0
    %1218 = vmatpush1.bf16.msra.mxu0 0
    %1219 = vmatprep.subr.bf16.mxu0 0
    %1220 = vmatpush1.bf16.msra.mxu0 0
    %1221 = vmatprep.subr.bf16.mxu0 0
    %1222 = vmatpush1.bf16.msra.mxu0 0
    %1223 = vmatprep.mubr.bf16.mxu0 0
    %1224 = vmatmul.mubr.bf16.gmra.mrb[0].mxu0 %v1189
    %v1225 = vpop.f32.mrb[0].mxu0
    %v1226 = vadd.f32 %v216, %v1225
    %v1227 = vpop.f32.mrb[0].mxu0
    %v1228 = vpop.f32.mrb[0].mxu0
    %v1229 = vpop.f32.mrb[0].mxu0
    %1230 = vdwg.mxu0
    %v1231 = vxor.u32 %v1226, 2147483648
    %v1232 = vmul.f32 %v1231, 1.442695
    %v1233 = vpow.pop %v1232
    %v1234 = vadd.f32 %v1233, 1.0
    %v1235 = vrcp.pop %v1234
    %v1236 = vmul.f32 1.0, %v1235
    %v1237 = vtanh.pop %v1226
    %v1238 = vmul.f32 %v1236, %v1089
    %1240 = vrot.lane.b32.xlu0 %v1237, 32
    %v1241 = vpop.permute.xlu0 %1240
    %v1243 = vmul.f32 %v1236, %v1241
    %1245 = vrot.lane.b32.xlu0 %v1243, 32
    %v1246 = vpop.permute.xlu0 %1245
    %v1248 = vadd.f32 %v1238, %v1246
    %v1249 = vtanh.pop %v1248
    %1251 = vrot.lane.b32.xlu0 %v1249, 32
    %v1252 = vpop.permute.xlu0 %1251
    %v1254 = vmul.f32 %v1236, %v1252
    %v1255 = vpack.c.bf16 %v1174, %v1174
    %v1257 = vrot.slane %v1255, 2
    %1258 = vrot.lane.b32.xlu0 %v1257, 64
    %v1259 = vpop.permute.xlu0 %1258
    %v1261 = vsel %vm82, %v1259, 0
    %1263 = vmatprep.subr.bf16.mxu0 0
    %1264 = vmatpush1.bf16.msra.mxu0 %v135
    %1265 = vmatprep.subr.bf16.mxu0 0
    %1266 = vmatpush1.bf16.msra.mxu0 %v136
    %1267 = vmatprep.subr.bf16.mxu0 0
    %1268 = vmatpush1.bf16.msra.mxu0 0
    %1269 = vmatprep.subr.bf16.mxu0 0
    %1270 = vmatpush1.bf16.msra.mxu0 0
    %1271 = vmatprep.subr.bf16.mxu0 0
    %1272 = vmatpush1.bf16.msra.mxu0 0
    %1273 = vmatprep.subr.bf16.mxu0 0
    %1274 = vmatpush1.bf16.msra.mxu0 0
    %1275 = vmatprep.subr.bf16.mxu0 0
    %1276 = vmatpush1.bf16.msra.mxu0 0
    %1277 = vmatprep.subr.bf16.mxu0 0
    %1278 = vmatpush1.bf16.msra.mxu0 0
    %1279 = vmatprep.subr.bf16.mxu0 0
    %1280 = vmatpush1.bf16.msra.mxu0 0
    %1281 = vmatprep.subr.bf16.mxu0 0
    %1282 = vmatpush1.bf16.msra.mxu0 0
    %1283 = vmatprep.subr.bf16.mxu0 0
    %1284 = vmatpush1.bf16.msra.mxu0 0
    %1285 = vmatprep.subr.bf16.mxu0 0
    %1286 = vmatpush1.bf16.msra.mxu0 0
    %1287 = vmatprep.subr.bf16.mxu0 0
    %1288 = vmatpush1.bf16.msra.mxu0 0
    %1289 = vmatprep.subr.bf16.mxu0 0
    %1290 = vmatpush1.bf16.msra.mxu0 0
    %1291 = vmatprep.subr.bf16.mxu0 0
    %1292 = vmatpush1.bf16.msra.mxu0 0
    %1293 = vmatprep.subr.bf16.mxu0 0
    %1294 = vmatpush1.bf16.msra.mxu0 0
    %1295 = vmatprep.mubr.bf16.mxu0 0
    %1296 = vmatmul.mubr.bf16.gmra.mrb[0].mxu0 %v1261
    %v1297 = vpop.f32.mrb[0].mxu0
    %v1298 = vadd.f32 0.0, %v1297
    %v1299 = vpop.f32.mrb[0].mxu0
    %v1300 = vpop.f32.mrb[0].mxu0
    %v1301 = vpop.f32.mrb[0].mxu0
    %1302 = vdwg.mxu0
    %v1304 = vrot.slane %v1298, 2
    %v1306 = vadd.f32 %v124, %v1304
    %v1307 = vxor.u32 %v1306, 2147483648
    %v1308 = vmul.f32 %v1307, 1.442695
    %v1309 = vpow.pop %v1308
    %v1310 = vadd.f32 %v1309, 1.0
    %v1311 = vrcp.pop %v1310
    %v1312 = vmul.f32 1.0, %v1311
    %v1313 = vtanh.pop %v1306
    %v1315 = vrot.slane %v1168, 6
    %v1317 = vmul.f32 %v1312, %v1315
    %1319 = vrot.lane.b32.xlu0 %v1313, 32
    %v1320 = vpop.permute.xlu0 %1319
    %v1322 = vmul.f32 %v1312, %v1320
    %1324 = vrot.lane.b32.xlu0 %v1322, 32
    %v1325 = vpop.permute.xlu0 %1324
    %v1327 = vadd.f32 %v1317, %v1325
    %v1328 = vtanh.pop %v1327
    %1330 = vrot.lane.b32.xlu0 %v1328, 32
    %v1331 = vpop.permute.xlu0 %1330
    %v1333 = vmul.f32 %v1312, %v1331
    %1335 = vrot.lane.b32.xlu0 %v1333, 64
    %v1336 = vpop.permute.xlu0 %1335
    %v1339 = vrot.slane %v1254, 2
    %1340 = vrot.lane.b32.xlu0 %v1339, 96
    %v1341 = vpop.permute.xlu0 %1340
    %v1343 = vsel %vm82, %v1336, %v1341
    %v1344 = vpack.c.bf16 %v1343, %v1343
    %v1346 = vrot.slane %v1344, 3
    %v1348 = vsel %vm241, %v1346, 0
    %1350 = vmatprep.subr.bf16.mxu0 0
    %1351 = vmatpush1.bf16.msra.mxu0 %v233
    %1352 = vmatprep.subr.bf16.mxu0 0
    %1353 = vmatpush1.bf16.msra.mxu0 %v234
    %1354 = vmatprep.subr.bf16.mxu0 0
    %1355 = vmatpush1.bf16.msra.mxu0 %v235
    %1356 = vmatprep.subr.bf16.mxu0 0
    %1357 = vmatpush1.bf16.msra.mxu0 %v236
    %1358 = vmatprep.subr.bf16.mxu0 0
    %1359 = vmatpush1.bf16.msra.mxu0 0
    %1360 = vmatprep.subr.bf16.mxu0 0
    %1361 = vmatpush1.bf16.msra.mxu0 0
    %1362 = vmatprep.subr.bf16.mxu0 0
    %1363 = vmatpush1.bf16.msra.mxu0 0
    %1364 = vmatprep.subr.bf16.mxu0 0
    %1365 = vmatpush1.bf16.msra.mxu0 0
    %1366 = vmatprep.subr.bf16.mxu0 0
    %1367 = vmatpush1.bf16.msra.mxu0 0
    %1368 = vmatprep.subr.bf16.mxu0 0
    %1369 = vmatpush1.bf16.msra.mxu0 0
    %1370 = vmatprep.subr.bf16.mxu0 0
    %1371 = vmatpush1.bf16.msra.mxu0 0
    %1372 = vmatprep.subr.bf16.mxu0 0
    %1373 = vmatpush1.bf16.msra.mxu0 0
    %1374 = vmatprep.subr.bf16.mxu0 0
    %1375 = vmatpush1.bf16.msra.mxu0 0
    %1376 = vmatprep.subr.bf16.mxu0 0
    %1377 = vmatpush1.bf16.msra.mxu0 0
    %1378 = vmatprep.subr.bf16.mxu0 0
    %1379 = vmatpush1.bf16.msra.mxu0 0
    %1380 = vmatprep.subr.bf16.mxu0 0
    %1381 = vmatpush1.bf16.msra.mxu0 0
    %1382 = vmatprep.mubr.bf16.mxu0 0
    %1383 = vmatmul.mubr.bf16.gmra.mrb[0].mxu0 %v1348
    %v1384 = vpop.f32.mrb[0].mxu0
    %v1385 = vadd.f32 %v216, %v1384
    %v1386 = vpop.f32.mrb[0].mxu0
    %v1387 = vpop.f32.mrb[0].mxu0
    %v1388 = vpop.f32.mrb[0].mxu0
    %1389 = vdwg.mxu0
    %v1390 = vxor.u32 %v1385, 2147483648
    %v1391 = vmul.f32 %v1390, 1.442695
    %v1392 = vpow.pop %v1391
    %v1393 = vadd.f32 %v1392, 1.0
    %v1394 = vrcp.pop %v1393
    %v1395 = vmul.f32 1.0, %v1394
    %v1396 = vtanh.pop %v1385
    %v1397 = vmul.f32 %v1395, %v1248
    %1399 = vrot.lane.b32.xlu0 %v1396, 32
    %v1400 = vpop.permute.xlu0 %1399
    %v1402 = vmul.f32 %v1395, %v1400
    %1404 = vrot.lane.b32.xlu0 %v1402, 32
    %v1405 = vpop.permute.xlu0 %1404
    %v1407 = vadd.f32 %v1397, %v1405
    %v1408 = vtanh.pop %v1407
    %1410 = vrot.lane.b32.xlu0 %v1408, 32
    %v1411 = vpop.permute.xlu0 %1410
    %v1413 = vmul.f32 %v1395, %v1411
    %v1414 = vpack.c.bf16 %v1413, %v1413
    %v1415 = vlaneseq
    %v1416 = vshrl.u32 %v1415, 7
    %v1417 = vsub.s32 1, %v1416
    %v1418 = vrot.slane %v62, %v1417
    %1420 = vrot.lane.b32.xlu0 %v1414, 64
    %v1421 = vpop.permute.xlu0 %1420
    %v1426 = vunpack.c.l.b16 %v57
    %v1427 = vunpack.c.l.b16 %v58
    %v1428 = vunpack.c.l.b16 %v59
    %v1429 = vunpack.c.l.b16 %v60
    %v1430 = vpack.c.b16 %v1427, %v1426
    %v1431 = vpack.c.b16 %v1429, %v1428
    %v1435 = vsel %vm82, %v1421, 0
    %1437 = vmatprep.subr.bf16.mxu0 0
    %1438 = vmatpush1.bf16.msra.mxu0 %v1430
    %1439 = vmatprep.subr.bf16.mxu0 0
    %1440 = vmatpush1.bf16.msra.mxu0 %v1431
    %1441 = vmatprep.subr.bf16.mxu0 0
    %1442 = vmatpush1.bf16.msra.mxu0 0
    %1443 = vmatprep.subr.bf16.mxu0 0
    %1444 = vmatpush1.bf16.msra.mxu0 0
    %1445 = vmatprep.subr.bf16.mxu0 0
    %1446 = vmatpush1.bf16.msra.mxu0 0
    %1447 = vmatprep.subr.bf16.mxu0 0
    %1448 = vmatpush1.bf16.msra.mxu0 0
    %1449 = vmatprep.subr.bf16.mxu0 0
    %1450 = vmatpush1.bf16.msra.mxu0 0
    %1451 = vmatprep.subr.bf16.mxu0 0
    %1452 = vmatpush1.bf16.msra.mxu0 0
    %1453 = vmatprep.subr.bf16.mxu0 0
    %1454 = vmatpush1.bf16.msra.mxu0 0
    %1455 = vmatprep.subr.bf16.mxu0 0
    %1456 = vmatpush1.bf16.msra.mxu0 0
    %1457 = vmatprep.subr.bf16.mxu0 0
    %1458 = vmatpush1.bf16.msra.mxu0 0
    %1459 = vmatprep.subr.bf16.mxu0 0
    %1460 = vmatpush1.bf16.msra.mxu0 0
    %1461 = vmatprep.subr.bf16.mxu0 0
    %1462 = vmatpush1.bf16.msra.mxu0 0
    %1463 = vmatprep.subr.bf16.mxu0 0
    %1464 = vmatpush1.bf16.msra.mxu0 0
    %1465 = vmatprep.subr.bf16.mxu0 0
    %1466 = vmatpush1.bf16.msra.mxu0 0
    %1467 = vmatprep.subr.bf16.mxu0 0
    %1468 = vmatpush1.bf16.msra.mxu0 0
    %1469 = vmatprep.mubr.bf16.mxu0 0
    %1470 = vmatmul.mubr.bf16.gmra.mrb[0].mxu0 %v1435
    %v1471 = vpop.f32.mrb[0].mxu0
    %v1472 = vadd.f32 %v1418, %v1471
    %v1473 = vpop.f32.mrb[0].mxu0
    %v1474 = vpop.f32.mrb[0].mxu0
    %v1475 = vpop.f32.mrb[0].mxu0
    %1476 = vdwg.mxu0
    %vm1477 = vcmask 254976
    %1478 = vst.msk [vmem:[#allocation7] sm:$0x3] %vm1477, %v1472
    // Predicated region
    $region18: #{tpu_custom_call.1} parent=1 // pred_check
      _
    $region19: #{tpu_custom_call.1} parent=1 // pred_check_branch
      %1480 = sbr.rel (0) target = $region21
    $region20: #{tpu_custom_call.1} parent=1 // pred_region
      %s1482 = ssub.s32 32, 32
      %1483 = vsyncadd [#allocation4], %s1482
      %s1485 = sshll.u32 [#allocation7], 4
      %s1486 = int_to_ptr.vmem [resolvable:$true] %s1485
      %1488 = dma.vmem_to_hbm [thread:$0]  %s1486, 32, %s2, [#allocation4]
    $region21: #{tpu_custom_call.1} parent=1 // pred_fallthru
      _
    // Predicated region
    $region22: #{tpu_custom_call.1} parent=1 // pred_check
      _
    $region23: #{tpu_custom_call.1} parent=1 // pred_check_branch
      %1490 = sbr.rel (0) target = $region25
    $region24: #{tpu_custom_call.1} parent=1 // pred_region
      %1491 = dma.done [#allocation4], 32
    $region25: #{tpu_custom_call.1} parent=1 // pred_fallthru
      _
    %1492 = vsyncpa [#allocation3], 1
    %1493 = vsyncpa [#allocation6], 1
    %1494 = vsyncpa [#allocation4], 1

</llo_original>
